<compile_context>
chip_gen: v6e
topology: v6e:2x2x1
jax: 0.10.0
libtpu: 0.0.40
codegen_flags: <defaults>
</compile_context>

<pallas_src>
import jax
import jax.numpy as jnp
import numpy as np
from jax.experimental import pallas as pl
from jax.experimental.pallas import tpu as pltpu

EPS = 1e-5  # nn.BatchNorm2d default eps


def _pick_tile(m, cap=256):
    """Largest power-of-two tile (>=128) dividing m, else m (single tile).

    cap is tunable: 512-1024 is better for large inputs on v6e, roughly half
    that on v7x (64 MiB VMEM).  256 keeps the multi-tile paths exercised at the
    small test shapes while staying far under VMEM on every generation.
    """
    t = cap
    while t >= 128:
        if m % t == 0:
            return t
        t //= 2
    return m


# ----------------------------- Pallas kernels ------------------------------ #

def _make_conv_stats_kernel(m_total, eps):
    """Conv (folded 9-tap matmul) + BN batch statistics, tiled over M."""
    inv_m = 1.0 / float(m_total)

    def kernel(xcol_ref, w_ref, g_ref, b_ref,
               z_ref, scale_ref, shift_ref, sum_ref, ssq_ref):
        @pl.when(pl.program_id(0) == 0)
        def _init():
            sum_ref[...] = jnp.zeros_like(sum_ref)
            ssq_ref[...] = jnp.zeros_like(ssq_ref)

        # Single MXU matmul per tile: (Cout, 9*Cin) @ (9*Cin, TM) -> f32
        z = jnp.dot(w_ref[...], xcol_ref[...],
                    preferred_element_type=jnp.float32)
        z_ref[...] = z

        # One-pass BN statistics (f32 accumulation).
        sum_ref[...] += jnp.sum(z, axis=1, keepdims=True)
        ssq_ref[...] += jnp.sum(z * z, axis=1, keepdims=True)

        @pl.when(pl.program_id(0) == pl.num_programs(0) - 1)
        def _finalize():
            mean = sum_ref[...] * inv_m
            var = ssq_ref[...] * inv_m - mean * mean      # biased, as BN training
            sc = g_ref[...] * jax.lax.rsqrt(var + eps)
            scale_ref[...] = sc
            shift_ref[...] = b_ref[...] - mean * sc

    return kernel


def _deconv_kernel(zsh_ref, mh_ref, mw_ref, scale_ref, shift_ref, wd_ref, out_ref):
    """Fused BN-apply + ReLU + 4-phase transposed-conv matmul (one M tile)."""
    c = scale_ref.shape[0]
    sc = scale_ref[...]                       # (C, 1)   f32
    sh = shift_ref[...]                       # (C, 1)   f32
    zs = zsh_ref[...]                         # (4C, TM) f32: shifts (0,0),(0,1),(1,0),(1,1)
    mh = mh_ref[...]                          # (1, TM)  valid for h-shift
    mw = mw_ref[...]                          # (1, TM)  valid for w-shift
    # BN apply + ReLU in f32; masks zero the out-of-image shifted samples
    # (they must behave as zero-padded *post*-ReLU activations).
    y0 = jnp.maximum(zs[0 * c:1 * c, :] * sc + sh, 0.0)
    y1 = jnp.maximum(zs[1 * c:2 * c, :] * sc + sh, 0.0) * mw
    y2 = jnp.maximum(zs[2 * c:3 * c, :] * sc + sh, 0.0) * mh
    y3 = jnp.maximum(zs[3 * c:4 * c, :] * sc + sh, 0.0) * (mh * mw)
    y4 = jnp.concatenate([y0, y1, y2, y3], axis=0).astype(jnp.bfloat16)  # (4C, TM)
    # (4C_phase_out, 4C_shift_in) @ (4C_shift_in, TM) -> (4C, TM) f32
    out_ref[...] = jnp.dot(wd_ref[...], y4, preferred_element_type=jnp.float32)


# --------------------------------- wrapper ---------------------------------- #

def upsample_forward(x_nchw, w_conv, gamma, beta, w_deconv):
    """Forward pass of `Upsample`.

    x_nchw:   (N, Cin, H, W)
    w_conv:   (Cout, Cin, 3, 3)   -- PyTorch Conv2d layout
    gamma:    (Cout,)             -- BN weight
    beta:     (Cout,)             -- BN bias
    w_deconv: (Cout, Cout, 3, 3)  -- PyTorch ConvTranspose2d (in, out, kh, kw)
    returns:  (N, Cout, 2H, 2W)
    """
    n, cin, h, w = x_nchw.shape
    cout = w_conv.shape[0]
    m = n * h * w

    x = x_nchw.astype(jnp.float32)

    # ---- conv lowering: im2col with taps folded into K, spatial on lanes ----
    xpad = jnp.pad(x, ((0, 0), (0, 0), (1, 1), (1, 1)))
    taps = [xpad[:, :, kh:kh + h, kw:kw + w] for kh in range(3) for kw in range(3)]
    xcol = jnp.stack(taps, axis=0)                                  # (9, N, Cin, H, W)
    xcolT = jnp.transpose(xcol, (0, 2, 1, 3, 4)).reshape(9 * cin, m)
    xcolT = xcolT.astype(jnp.bfloat16)                              # bf16 matmul operand

    wc9 = jnp.transpose(w_conv, (0, 2, 3, 1)).reshape(cout, 9 * cin)
    wc9 = wc9.astype(jnp.bfloat16)
    g2 = gamma.reshape(cout, 1).astype(jnp.float32)
    b2 = beta.reshape(cout, 1).astype(jnp.float32)

    tm_a = _pick_tile(m)
    grid_a = (m // tm_a,)
    z, scale, shift = pl.pallas_call(
        _make_conv_stats_kernel(m, EPS),
        out_shape=(
            jax.ShapeDtypeStruct((cout, m), jnp.float32),   # pre-BN conv output
            jax.ShapeDtypeStruct((cout, 1), jnp.float32),   # BN scale
            jax.ShapeDtypeStruct((cout, 1), jnp.float32),   # BN shift
        ),
        grid=grid_a,
        in_specs=[
            pl.BlockSpec((9 * cin, tm_a), lambda i: (0, i)),
            pl.BlockSpec((cout, 9 * cin), lambda i: (0, 0)),
            pl.BlockSpec((cout, 1), lambda i: (0, 0)),
            pl.BlockSpec((cout, 1), lambda i: (0, 0)),
        ],
        out_specs=(
            pl.BlockSpec((cout, tm_a), lambda i: (0, i)),
            pl.BlockSpec((cout, 1), lambda i: (0, 0)),
            pl.BlockSpec((cout, 1), lambda i: (0, 0)),
        ),
        scratch_shapes=[pltpu.VMEM((cout, 1), jnp.float32),
                        pltpu.VMEM((cout, 1), jnp.float32)],
        compiler_params=pltpu.CompilerParams(
            # BN statistics reduce across M tiles -> sequential axis.
            dimension_semantics=("arbitrary",),
            vmem_limit_bytes=32 * 1024 * 1024),
        cost_estimate=pl.CostEstimate(
            flops=2 * m * 9 * cin * cout,
            transcendentals=0,
            bytes_accessed=2 * 9 * cin * m + 4 * cout * m),
    )(xcolT, wc9, g2, b2)

    # ---- deconv lowering: 4-phase (sub-pixel) decomposition -----------------
    # Output phase (ph, pw) of the 2x-upsampled image needs y shifted by
    # (dh, dw) in {0,1}^2.  Build the shifted copies of the *pre-BN* conv
    # output; kernel B applies BN + ReLU (masking the out-of-image samples).
    zr = z.reshape(cout, n, h, w)
    zp = jnp.pad(zr, ((0, 0), (0, 0), (0, 1), (0, 1)))
    zsh = jnp.concatenate(
        [zp[:, :, dh:dh + h, dw:dw + w].reshape(cout, m)
         for dh, dw in ((0, 0), (0, 1), (1, 0), (1, 1))], axis=0)   # (4C, M) f32

    mh = jnp.broadcast_to((jnp.arange(h) < h - 1).astype(jnp.float32)[None, :, None],
                          (n, h, w)).reshape(1, m)
    mw = jnp.broadcast_to((jnp.arange(w) < w - 1).astype(jnp.float32)[None, None, :],
                          (n, h, w)).reshape(1, m)

    # Phase/shift weight matrix Wd[(phase, out_ch), (shift, in_ch)] from the
    # ConvTranspose2d(k=3, s=2, p=1, output_padding=1) tap decomposition.
    wdf = w_deconv.astype(jnp.float32)

    def blk(kh, kw):
        return wdf[:, :, kh, kw].T            # (out, in)

    c = cout
    wd = jnp.zeros((4 * c, 4 * c), jnp.float32)
    wd = wd.at[0 * c:1 * c, 0 * c:1 * c].set(blk(1, 1))   # phase (0,0)
    wd = wd.at[1 * c:2 * c, 0 * c:1 * c].set(blk(1, 2))   # phase (0,1)
    wd = wd.at[1 * c:2 * c, 1 * c:2 * c].set(blk(1, 0))
    wd = wd.at[2 * c:3 * c, 0 * c:1 * c].set(blk(2, 1))   # phase (1,0)
    wd = wd.at[2 * c:3 * c, 2 * c:3 * c].set(blk(0, 1))
    wd = wd.at[3 * c:4 * c, 0 * c:1 * c].set(blk(2, 2))   # phase (1,1)
    wd = wd.at[3 * c:4 * c, 1 * c:2 * c].set(blk(2, 0))
    wd = wd.at[3 * c:4 * c, 2 * c:3 * c].set(blk(0, 2))
    wd = wd.at[3 * c:4 * c, 3 * c:4 * c].set(blk(0, 0))
    wd = wd.astype(jnp.bfloat16)

    tm_b = _pick_tile(m)
    grid_b = (m // tm_b,)
    out4 = pl.pallas_call(
        _deconv_kernel,
        out_shape=jax.ShapeDtypeStruct((4 * c, m), jnp.float32),
        grid=grid_b,
        in_specs=[
            pl.BlockSpec((4 * c, tm_b), lambda i: (0, i)),
            pl.BlockSpec((1, tm_b), lambda i: (0, i)),
            pl.BlockSpec((1, tm_b), lambda i: (0, i)),
            pl.BlockSpec((c, 1), lambda i: (0, 0)),
            pl.BlockSpec((c, 1), lambda i: (0, 0)),
            pl.BlockSpec((4 * c, 4 * c), lambda i: (0, 0)),
        ],
        out_specs=pl.BlockSpec((4 * c, tm_b), lambda i: (0, i)),
        compiler_params=pltpu.CompilerParams(
            dimension_semantics=("parallel",),     # independent tiles (megacore)
            vmem_limit_bytes=32 * 1024 * 1024),
        cost_estimate=pl.CostEstimate(
            flops=2 * m * (4 * c) * (4 * c),
            transcendentals=0,
            bytes_accessed=4 * 4 * c * m + 4 * 4 * c * m),
    )(zsh, mh, mw, scale, shift, wd)

    # Interleave the 4 phases into the (N, C, 2H, 2W) output.
    out = out4.reshape(2, 2, c, n, h, w)                  # (ph, pw, o, n, a, b)
    out = jnp.transpose(out, (3, 2, 4, 0, 5, 1))          # (n, o, a, ph, b, pw)
    return out.reshape(n, c, 2 * h, 2 * w)


# ------------------------ independent numpy reference ---------------------- #

def _reference_forward(x, w_conv, gamma, beta, w_deconv):
    x = np.asarray(x, np.float64)
    wc = np.asarray(w_conv, np.float64)
    wt = np.asarray(w_deconv, np.float64)
    g = np.asarray(gamma, np.float64)
    b = np.asarray(beta, np.float64)
    n, cin, h, w = x.shape
    cout = wc.shape[0]

    xp = np.pad(x, ((0, 0), (0, 0), (1, 1), (1, 1)))
    c = np.zeros((n, cout, h, w))
    for kh in range(3):
        for kw in range(3):
            c += np.einsum('nihw,oi->nohw', xp[:, :, kh:kh + h, kw:kw + w],
                           wc[:, :, kh, kw])

    mean = c.mean(axis=(0, 2, 3), keepdims=True)
    var = c.var(axis=(0, 2, 3), keepdims=True)        # biased, as in BN training
    y = g[None, :, None, None] * (c - mean) / np.sqrt(var + EPS) + b[None, :, None, None]
    y = np.maximum(y, 0.0)

    ho, wo = 2 * h, 2 * w
    out = np.zeros((n, cout, ho, wo))
    for kh in range(3):
        for kw in range(3):
            for ih in range(h):
                oh = 2 * ih - 1 + kh
                if oh < 0 or oh >= ho:
                    continue
                for iw in range(w):
                    ow = 2 * iw - 1 + kw
                    if ow < 0 or ow >= wo:
                        continue
                    out[:, :, oh, ow] += np.einsum('ni,io->no', y[:, :, ih, iw],
                                                   wt[:, :, kh, kw])
    return out


# ----------------------------------- main ----------------------------------- #

if __name__ == "__main__":
    key = jax.random.PRNGKey(0)
    k1, k2, k3, k4, k5 = jax.random.split(key, 5)

    N, CIN, COUT, H, W = 2, 4, 8, 16, 16
    x = jax.random.normal(k1, (N, CIN, H, W), jnp.float32)
    # Deterministic synthetic parameters (shapes match the module's __init__).
    w_conv = jax.random.normal(k2, (COUT, CIN, 3, 3), jnp.float32) * 0.2
    gamma = jax.random.uniform(k3, (COUT,), jnp.float32, minval=0.5, maxval=1.5)
    beta = jax.random.normal(k4, (COUT,), jnp.float32) * 0.1
    w_deconv = jax.random.normal(k5, (COUT, COUT, 3, 3), jnp.float32) * 0.2

    fwd = jax.jit(upsample_forward)
    out = jax.block_until_ready(fwd(x, w_conv, gamma, beta, w_deconv))
    assert out.shape == (N, COUT, 2 * H, 2 * W), out.shape

    ref = _reference_forward(np.asarray(x), np.asarray(w_conv), np.asarray(gamma),
                             np.asarray(beta), np.asarray(w_deconv))
    # bf16 MXU operands -> bf16-level tolerance (f32 accumulation / BN math).
    np.testing.assert_allclose(np.asarray(out), ref, rtol=2e-2, atol=2e-2)

    print("KERNEL_OK")
</pallas_src>

<mosaic_0001>
module attributes {stable_mosaic.version = 11 : i64} {
  func.func @kernel(%arg0: i32, %arg1: memref<36x256xbf16, #tpu.memory_space<vmem>>, %arg2: memref<8x36xbf16, #tpu.memory_space<vmem>>, %arg3: memref<8x1xf32, #tpu.memory_space<vmem>>, %arg4: memref<8x1xf32, #tpu.memory_space<vmem>>, %arg5: memref<8x256xf32, #tpu.memory_space<vmem>>, %arg6: memref<8x1xf32, #tpu.memory_space<vmem>>, %arg7: memref<8x1xf32, #tpu.memory_space<vmem>>, %arg8: memref<8x1xf32, #tpu.memory_space<vmem>>, %arg9: memref<8x1xf32, #tpu.memory_space<vmem>>) attributes {dimension_semantics = [#tpu.dimension_semantics<arbitrary>], iteration_bounds = array<i64: 2>, scalar_prefetch = 0 : i64, scratch_operands = 2 : i64, tpu.core_type = #tpu.core_type<tc>, window_params = [{transform_indices = @transform_0, window_bounds = array<i64: 36, 256>}, {pipeline_mode = #tpu.pipeline_mode<synchronous>, transform_indices = @transform_1, window_bounds = array<i64: 8, 36>}, {pipeline_mode = #tpu.pipeline_mode<synchronous>, transform_indices = @transform_2, window_bounds = array<i64: 8, 1>}, {pipeline_mode = #tpu.pipeline_mode<synchronous>, transform_indices = @transform_3, window_bounds = array<i64: 8, 1>}, {transform_indices = @transform_4, window_bounds = array<i64: 8, 256>}, {pipeline_mode = #tpu.pipeline_mode<synchronous>, transform_indices = @transform_5, window_bounds = array<i64: 8, 1>}, {pipeline_mode = #tpu.pipeline_mode<synchronous>, transform_indices = @transform_6, window_bounds = array<i64: 8, 1>}]} {
    %c0_i32 = arith.constant 0 : i32
    %0 = arith.cmpi eq, %arg0, %c0_i32 : i32
    %1 = arith.extui %0 : i1 to i32
    %c0_i32_0 = arith.constant 0 : i32
    %2 = arith.cmpi ne, %1, %c0_i32_0 : i32
    scf.if %2 {
      %cst_17 = arith.constant 0.000000e+00 : f32
      %21 = vector.broadcast %cst_17 : f32 to vector<8x1xf32>
      %c0_18 = arith.constant 0 : index
      %c0_19 = arith.constant 0 : index
      %22 = vector.load %arg8[%c0_18, %c0_19] : memref<8x1xf32, #tpu.memory_space<vmem>>, vector<8x1xf32>
      tpu.vector_store %arg8[%c0_18, %c0_19], %21 {strides = array<i32>} : memref<8x1xf32, #tpu.memory_space<vmem>>, vector<8x1xf32>,
      %cst_20 = arith.constant 0.000000e+00 : f32
      %23 = vector.broadcast %cst_20 : f32 to vector<8x1xf32>
      %c0_21 = arith.constant 0 : index
      %c0_22 = arith.constant 0 : index
      %24 = vector.load %arg9[%c0_21, %c0_22] : memref<8x1xf32, #tpu.memory_space<vmem>>, vector<8x1xf32>
      tpu.vector_store %arg9[%c0_21, %c0_22], %23 {strides = array<i32>} : memref<8x1xf32, #tpu.memory_space<vmem>>, vector<8x1xf32>,
    } else {
    }
    %c0 = arith.constant 0 : index
    %c0_1 = arith.constant 0 : index
    %3 = vector.load %arg2[%c0, %c0_1] : memref<8x36xbf16, #tpu.memory_space<vmem>>, vector<8x36xbf16>
    %c0_2 = arith.constant 0 : index
    %c0_3 = arith.constant 0 : index
    %4 = vector.load %arg1[%c0_2, %c0_3] : memref<36x256xbf16, #tpu.memory_space<vmem>>, vector<36x256xbf16>
    %cst = arith.constant dense<0.000000e+00> : vector<8x256xf32>
    %5 = tpu.matmul %3, %4, %cst {dimension_numbers = #tpu.dot_dimension_numbers<[1], [0], [0], [1], [0, 0, 1, 1], [], []>} : vector<8x36xbf16>, vector<36x256xbf16>, vector<8x256xf32> -> vector<8x256xf32>
    %c0_4 = arith.constant 0 : index
    %c0_5 = arith.constant 0 : index
    %6 = vector.load %arg5[%c0_4, %c0_5] : memref<8x256xf32, #tpu.memory_space<vmem>>, vector<8x256xf32>
    tpu.vector_store %arg5[%c0_4, %c0_5], %5 {strides = array<i32>} : memref<8x256xf32, #tpu.memory_space<vmem>>, vector<8x256xf32>,
    %c0_6 = arith.constant 0 : index
    %c0_7 = arith.constant 0 : index
    %7 = vector.load %arg8[%c0_6, %c0_7] : memref<8x1xf32, #tpu.memory_space<vmem>>, vector<8x1xf32>
    %cst_8 = arith.constant dense<0.000000e+00> : vector<8xf32>
    %8 = vector.multi_reduction <add>, %5, %cst_8 [1] : vector<8x256xf32> to vector<8xf32>
    %9 = vector.shape_cast %8 : vector<8xf32> to vector<8x1xf32>
    %10 = arith.addf %7, %9 : vector<8x1xf32>
    %c0_9 = arith.constant 0 : index
    %c0_10 = arith.constant 0 : index
    %11 = vector.load %arg8[%c0_9, %c0_10] : memref<8x1xf32, #tpu.memory_space<vmem>>, vector<8x1xf32>
    tpu.vector_store %arg8[%c0_9, %c0_10], %10 {strides = array<i32>} : memref<8x1xf32, #tpu.memory_space<vmem>>, vector<8x1xf32>,
    %c0_11 = arith.constant 0 : index
    %c0_12 = arith.constant 0 : index
    %12 = vector.load %arg9[%c0_11, %c0_12] : memref<8x1xf32, #tpu.memory_space<vmem>>, vector<8x1xf32>
    %13 = arith.mulf %5, %5 : vector<8x256xf32>
    %cst_13 = arith.constant dense<0.000000e+00> : vector<8xf32>
    %14 = vector.multi_reduction <add>, %13, %cst_13 [1] : vector<8x256xf32> to vector<8xf32>
    %15 = vector.shape_cast %14 : vector<8xf32> to vector<8x1xf32>
    %16 = arith.addf %12, %15 : vector<8x1xf32>
    %c0_14 = arith.constant 0 : index
    %c0_15 = arith.constant 0 : index
    %17 = vector.load %arg9[%c0_14, %c0_15] : memref<8x1xf32, #tpu.memory_space<vmem>>, vector<8x1xf32>
    tpu.vector_store %arg9[%c0_14, %c0_15], %16 {strides = array<i32>} : memref<8x1xf32, #tpu.memory_space<vmem>>, vector<8x1xf32>,
    %c1_i32 = arith.constant 1 : i32
    %18 = arith.cmpi eq, %arg0, %c1_i32 : i32
    %19 = arith.extui %18 : i1 to i32
    %c0_i32_16 = arith.constant 0 : i32
    %20 = arith.cmpi ne, %19, %c0_i32_16 : i32
    scf.if %20 {
      %c0_17 = arith.constant 0 : index
      %c0_18 = arith.constant 0 : index
      %21 = vector.load %arg8[%c0_17, %c0_18] : memref<8x1xf32, #tpu.memory_space<vmem>>, vector<8x1xf32>
      %cst_19 = arith.constant 0.001953125 : f32
      %22 = vector.broadcast %cst_19 : f32 to vector<8x1xf32>
      %23 = arith.mulf %21, %22 : vector<8x1xf32>
      %c0_20 = arith.constant 0 : index
      %c0_21 = arith.constant 0 : index
      %24 = vector.load %arg9[%c0_20, %c0_21] : memref<8x1xf32, #tpu.memory_space<vmem>>, vector<8x1xf32>
      %cst_22 = arith.constant 0.001953125 : f32
      %25 = vector.broadcast %cst_22 : f32 to vector<8x1xf32>
      %26 = arith.mulf %24, %25 : vector<8x1xf32>
      %27 = arith.mulf %23, %23 : vector<8x1xf32>
      %28 = arith.subf %26, %27 : vector<8x1xf32>
      %c0_23 = arith.constant 0 : index
      %c0_24 = arith.constant 0 : index
      %29 = vector.load %arg3[%c0_23, %c0_24] : memref<8x1xf32, #tpu.memory_space<vmem>>, vector<8x1xf32>
      %cst_25 = arith.constant 9.99999974E-6 : f32
      %30 = vector.broadcast %cst_25 : f32 to vector<8x1xf32>
      %31 = arith.addf %28, %30 : vector<8x1xf32>
      %32 = math.rsqrt %31 : vector<8x1xf32>
      %33 = arith.mulf %29, %32 : vector<8x1xf32>
      %c0_26 = arith.constant 0 : index
      %c0_27 = arith.constant 0 : index
      %34 = vector.load %arg6[%c0_26, %c0_27] : memref<8x1xf32, #tpu.memory_space<vmem>>, vector<8x1xf32>
      tpu.vector_store %arg6[%c0_26, %c0_27], %33 {strides = array<i32>} : memref<8x1xf32, #tpu.memory_space<vmem>>, vector<8x1xf32>,
      %c0_28 = arith.constant 0 : index
      %c0_29 = arith.constant 0 : index
      %35 = vector.load %arg4[%c0_28, %c0_29] : memref<8x1xf32, #tpu.memory_space<vmem>>, vector<8x1xf32>
      %36 = arith.mulf %23, %33 : vector<8x1xf32>
      %37 = arith.subf %35, %36 : vector<8x1xf32>
      %c0_30 = arith.constant 0 : index
      %c0_31 = arith.constant 0 : index
      %38 = vector.load %arg7[%c0_30, %c0_31] : memref<8x1xf32, #tpu.memory_space<vmem>>, vector<8x1xf32>
      tpu.vector_store %arg7[%c0_30, %c0_31], %37 {strides = array<i32>} : memref<8x1xf32, #tpu.memory_space<vmem>>, vector<8x1xf32>,
    } else {
    }
    return
  }
  func.func @transform_0(%arg0: i32) -> (i32, i32) {
    %c0_i32 = arith.constant 0 : i32
    %c0_i32_0 = arith.constant 0 : i32
    return %c0_i32, %arg0 : i32, i32
  }
  func.func @transform_1(%arg0: i32) -> (i32, i32) {
    %c0_i32 = arith.constant 0 : i32
    %c0_i32_0 = arith.constant 0 : i32
    %c0_i32_1 = arith.constant 0 : i32
    return %c0_i32, %c0_i32_0 : i32, i32
  }
  func.func @transform_2(%arg0: i32) -> (i32, i32) {
    %c0_i32 = arith.constant 0 : i32
    %c0_i32_0 = arith.constant 0 : i32
    %c0_i32_1 = arith.constant 0 : i32
    return %c0_i32, %c0_i32_0 : i32, i32
  }
  func.func @transform_3(%arg0: i32) -> (i32, i32) {
    %c0_i32 = arith.constant 0 : i32
    %c0_i32_0 = arith.constant 0 : i32
    %c0_i32_1 = arith.constant 0 : i32
    return %c0_i32, %c0_i32_0 : i32, i32
  }
  func.func @transform_4(%arg0: i32) -> (i32, i32) {
    %c0_i32 = arith.constant 0 : i32
    %c0_i32_0 = arith.constant 0 : i32
    return %c0_i32, %arg0 : i32, i32
  }
  func.func @transform_5(%arg0: i32) -> (i32, i32) {
    %c0_i32 = arith.constant 0 : i32
    %c0_i32_0 = arith.constant 0 : i32
    %c0_i32_1 = arith.constant 0 : i32
    return %c0_i32, %c0_i32_0 : i32, i32
  }
  func.func @transform_6(%arg0: i32) -> (i32, i32) {
    %c0_i32 = arith.constant 0 : i32
    %c0_i32_0 = arith.constant 0 : i32
    %c0_i32_1 = arith.constant 0 : i32
    return %c0_i32, %c0_i32_0 : i32, i32
  }
}

module attributes {stable_mosaic.version = 11 : i64} {
  func.func @_deconv_kernel(%arg0: i32, %arg1: memref<32x256xf32, #tpu.memory_space<vmem>>, %arg2: memref<1x256xf32, #tpu.memory_space<vmem>>, %arg3: memref<1x256xf32, #tpu.memory_space<vmem>>, %arg4: memref<8x1xf32, #tpu.memory_space<vmem>>, %arg5: memref<8x1xf32, #tpu.memory_space<vmem>>, %arg6: memref<32x32xbf16, #tpu.memory_space<vmem>>, %arg7: memref<32x256xf32, #tpu.memory_space<vmem>>) attributes {dimension_semantics = [#tpu.dimension_semantics<parallel>], iteration_bounds = array<i64: 2>, scalar_prefetch = 0 : i64, scratch_operands = 0 : i64, tpu.core_type = #tpu.core_type<tc>, window_params = [{transform_indices = @transform_0, window_bounds = array<i64: 32, 256>}, {transform_indices = @transform_1, window_bounds = array<i64: 1, 256>}, {transform_indices = @transform_2, window_bounds = array<i64: 1, 256>}, {pipeline_mode = #tpu.pipeline_mode<synchronous>, transform_indices = @transform_3, window_bounds = array<i64: 8, 1>}, {pipeline_mode = #tpu.pipeline_mode<synchronous>, transform_indices = @transform_4, window_bounds = array<i64: 8, 1>}, {pipeline_mode = #tpu.pipeline_mode<synchronous>, transform_indices = @transform_5, window_bounds = array<i64: 32, 32>}, {transform_indices = @transform_6, window_bounds = array<i64: 32, 256>}]} {
    %c0 = arith.constant 0 : index
    %c0_0 = arith.constant 0 : index
    %0 = vector.load %arg4[%c0, %c0_0] : memref<8x1xf32, #tpu.memory_space<vmem>>, vector<8x1xf32>
    %c0_1 = arith.constant 0 : index
    %c0_2 = arith.constant 0 : index
    %1 = vector.load %arg5[%c0_1, %c0_2] : memref<8x1xf32, #tpu.memory_space<vmem>>, vector<8x1xf32>
    %c0_3 = arith.constant 0 : index
    %c0_4 = arith.constant 0 : index
    %2 = vector.load %arg1[%c0_3, %c0_4] : memref<32x256xf32, #tpu.memory_space<vmem>>, vector<32x256xf32>
    %c0_5 = arith.constant 0 : index
    %c0_6 = arith.constant 0 : index
    %3 = vector.load %arg2[%c0_5, %c0_6] : memref<1x256xf32, #tpu.memory_space<vmem>>, vector<1x256xf32>
    %c0_7 = arith.constant 0 : index
    %c0_8 = arith.constant 0 : index
    %4 = vector.load %arg3[%c0_7, %c0_8] : memref<1x256xf32, #tpu.memory_space<vmem>>, vector<1x256xf32>
    %5 = vector.extract_strided_slice %2 {offsets = [0, 0], sizes = [8, 256], strides = [1, 1]} : vector<32x256xf32> to vector<8x256xf32>
    %6 = vector.broadcast %0 : vector<8x1xf32> to vector<8x256xf32>
    %7 = arith.mulf %5, %6 : vector<8x256xf32>
    %8 = vector.broadcast %1 : vector<8x1xf32> to vector<8x256xf32>
    %9 = arith.addf %7, %8 : vector<8x256xf32>
    %cst = arith.constant 0.000000e+00 : f32
    %10 = vector.broadcast %cst : f32 to vector<8x256xf32>
    %11 = arith.maximumf %9, %10 : vector<8x256xf32>
    %12 = vector.extract_strided_slice %2 {offsets = [8, 0], sizes = [8, 256], strides = [1, 1]} : vector<32x256xf32> to vector<8x256xf32>
    %13 = vector.broadcast %0 : vector<8x1xf32> to vector<8x256xf32>
    %14 = arith.mulf %12, %13 : vector<8x256xf32>
    %15 = vector.broadcast %1 : vector<8x1xf32> to vector<8x256xf32>
    %16 = arith.addf %14, %15 : vector<8x256xf32>
    %cst_9 = arith.constant 0.000000e+00 : f32
    %17 = vector.broadcast %cst_9 : f32 to vector<8x256xf32>
    %18 = arith.maximumf %16, %17 : vector<8x256xf32>
    %19 = vector.broadcast %4 : vector<1x256xf32> to vector<8x256xf32>
    %20 = arith.mulf %18, %19 : vector<8x256xf32>
    %21 = vector.extract_strided_slice %2 {offsets = [16, 0], sizes = [8, 256], strides = [1, 1]} : vector<32x256xf32> to vector<8x256xf32>
    %22 = vector.broadcast %0 : vector<8x1xf32> to vector<8x256xf32>
    %23 = arith.mulf %21, %22 : vector<8x256xf32>
    %24 = vector.broadcast %1 : vector<8x1xf32> to vector<8x256xf32>
    %25 = arith.addf %23, %24 : vector<8x256xf32>
    %cst_10 = arith.constant 0.000000e+00 : f32
    %26 = vector.broadcast %cst_10 : f32 to vector<8x256xf32>
    %27 = arith.maximumf %25, %26 : vector<8x256xf32>
    %28 = vector.broadcast %3 : vector<1x256xf32> to vector<8x256xf32>
    %29 = arith.mulf %27, %28 : vector<8x256xf32>
    %30 = vector.extract_strided_slice %2 {offsets = [24, 0], sizes = [8, 256], strides = [1, 1]} : vector<32x256xf32> to vector<8x256xf32>
    %31 = vector.broadcast %0 : vector<8x1xf32> to vector<8x256xf32>
    %32 = arith.mulf %30, %31 : vector<8x256xf32>
    %33 = vector.broadcast %1 : vector<8x1xf32> to vector<8x256xf32>
    %34 = arith.addf %32, %33 : vector<8x256xf32>
    %cst_11 = arith.constant 0.000000e+00 : f32
    %35 = vector.broadcast %cst_11 : f32 to vector<8x256xf32>
    %36 = arith.maximumf %34, %35 : vector<8x256xf32>
    %37 = arith.mulf %3, %4 : vector<1x256xf32>
    %38 = vector.broadcast %37 : vector<1x256xf32> to vector<8x256xf32>
    %39 = arith.mulf %36, %38 : vector<8x256xf32>
    %40 = tpu.concatenate %11, %20, %29, %39 in 0 : vector<8x256xf32>, vector<8x256xf32>, vector<8x256xf32>, vector<8x256xf32> -> vector<32x256xf32>
    %41 = arith.truncf %40 : vector<32x256xf32> to vector<32x256xbf16>
    %c0_12 = arith.constant 0 : index
    %c0_13 = arith.constant 0 : index
    %42 = vector.load %arg6[%c0_12, %c0_13] : memref<32x32xbf16, #tpu.memory_space<vmem>>, vector<32x32xbf16>
    %cst_14 = arith.constant dense<0.000000e+00> : vector<32x256xf32>
    %43 = tpu.matmul %42, %41, %cst_14 {dimension_numbers = #tpu.dot_dimension_numbers<[1], [0], [0], [1], [0, 0, 1, 1], [], []>} : vector<32x32xbf16>, vector<32x256xbf16>, vector<32x256xf32> -> vector<32x256xf32>
    %c0_15 = arith.constant 0 : index
    %c0_16 = arith.constant 0 : index
    %44 = vector.load %arg7[%c0_15, %c0_16] : memref<32x256xf32, #tpu.memory_space<vmem>>, vector<32x256xf32>
    tpu.vector_store %arg7[%c0_15, %c0_16], %43 {strides = array<i32>} : memref<32x256xf32, #tpu.memory_space<vmem>>, vector<32x256xf32>,
    return
  }
  func.func @transform_0(%arg0: i32) -> (i32, i32) {
    %c0_i32 = arith.constant 0 : i32
    %c0_i32_0 = arith.constant 0 : i32
    return %c0_i32, %arg0 : i32, i32
  }
  func.func @transform_1(%arg0: i32) -> (i32, i32) {
    %c0_i32 = arith.constant 0 : i32
    %c0_i32_0 = arith.constant 0 : i32
    return %c0_i32, %arg0 : i32, i32
  }
  func.func @transform_2(%arg0: i32) -> (i32, i32) {
    %c0_i32 = arith.constant 0 : i32
    %c0_i32_0 = arith.constant 0 : i32
    return %c0_i32, %arg0 : i32, i32
  }
  func.func @transform_3(%arg0: i32) -> (i32, i32) {
    %c0_i32 = arith.constant 0 : i32
    %c0_i32_0 = arith.constant 0 : i32
    %c0_i32_1 = arith.constant 0 : i32
    return %c0_i32, %c0_i32_0 : i32, i32
  }
  func.func @transform_4(%arg0: i32) -> (i32, i32) {
    %c0_i32 = arith.constant 0 : i32
    %c0_i32_0 = arith.constant 0 : i32
    %c0_i32_1 = arith.constant 0 : i32
    return %c0_i32, %c0_i32_0 : i32, i32
  }
  func.func @transform_5(%arg0: i32) -> (i32, i32) {
    %c0_i32 = arith.constant 0 : i32
    %c0_i32_0 = arith.constant 0 : i32
    %c0_i32_1 = arith.constant 0 : i32
    return %c0_i32, %c0_i32_0 : i32, i32
  }
  func.func @transform_6(%arg0: i32) -> (i32, i32) {
    %c0_i32 = arith.constant 0 : i32
    %c0_i32_0 = arith.constant 0 : i32
    return %c0_i32, %arg0 : i32, i32
  }
}

</mosaic_0001>

<llo_original>
// kernel: upsample_forward.2
$region0: #{upsample_forward.2}
  #allocation0 [shape = 'u32[]', space=smem, size = 0x4, offset = 0x4, fixed_abs, tag = 'smem constant byte address 0x4 - core index']
  #allocation1 [shape = 'u32[144,128]{1,0:T(1,128)}', space=vmem, size = 0x12000, scoped, tag = 'internal scratch']
  #allocation2 [shape = 'f32[8,1]{1,0:T(8,128)}', space=vmem, size = 0x1000, scoped, tag = 'scratch operand']
  #allocation3 [shape = 'f32[8,1]{1,0:T(8,128)}', space=vmem, size = 0x1000, scoped, tag = 'scratch operand']
  %s0 = inlined_call_operand.vmem [shape: bf16[36,512], index: 0, kind: input, shape index: {}]
  %s1 = inlined_call_operand.vmem [shape: bf16[8,36], index: 1, kind: input, shape index: {}]
  %s2 = inlined_call_operand.vmem [shape: f32[8,1], index: 2, kind: input, shape index: {}]
  %s3 = inlined_call_operand.vmem [shape: f32[8,1], index: 3, kind: input, shape index: {}]
  %s4 = inlined_call_operand.vmem [shape: f32[8,512], index: 4, kind: output, shape index: {0}]
  %s5 = inlined_call_operand.vmem [shape: f32[8,1], index: 5, kind: output, shape index: {1}]
  %s6 = inlined_call_operand.vmem [shape: f32[8,1], index: 6, kind: output, shape index: {2}]
  %7 = xla_tuple %s4, %s5, %s6
  %s8 = sld [smem:[#allocation0]]
  $region111: #{upsample_forward.2} parent=0
    _
  %s10 = ssub.s32 1, %s8
  %s11 = scalar_select 0, %s10, %s8
  $region1: #{upsample_forward.2} parent=0
    #allocation4 [shape = 'u8[40960]{0}', space=vmem, size = 0xa000, scoped, tag = 'input window, operand 0']
    loop: start=0, step=1, limit=4
    $region2: #{upsample_forward.2} parent=1 // loop_pre_header
      _
    $region3: #{upsample_forward.2} parent=1 // loop_header
      %s13 = sphi 0, %s17
      %p14 = scmp.ge.s32.totalorder %s13, 4
      %s23 = sphi 0, %s25
      %s26 = sphi 0, %s23
      %s27 = sphi 0, %s26
      %s43 = sphi 0, %s27
      %s47 = sphi 0, %s47
      %s49 = sphi 0, %s47
      %s50 = sphi 0, %s49
      %s64 = sphi 0, %s50
      %s68 = sphi 0, %s68
      %s70 = sphi 0, %s68
      %s71 = sphi 0, %s70
      %s85 = sphi 0, %s71
      %s89 = sphi 0, %s89
      %s91 = sphi 0, %s89
      %s92 = sphi 0, %s91
      %s106 = sphi 0, %s92
      %s112 = sphi 0, %s114
      %s115 = sphi 0, %s112
      %s116 = sphi 0, %s115
      %s132 = sphi 0, %s116
      %s136 = sphi 0, %s136
      %s138 = sphi 0, %s136
      %s139 = sphi 0, %s138
      %s153 = sphi 0, %s139
      %s157 = sphi 0, %s157
      %s159 = sphi 0, %s157
      %s160 = sphi 0, %s159
      %s174 = sphi 0, %s160
    $region4: #{upsample_forward.2} parent=1 // loop_header_branch
      %16 = sbr.rel (%p14) target = $region8
    $region5: #{upsample_forward.2} parent=1 // loop_body
      %s18 = ssub.s32 %s13, 1
      %s19 = ssub.s32 %s13, 2
      %s20 = sadd.s32 %s13, 1
      %s21 = ssub.s32 %s13, %s20
      %p22 = scmp.eq.s32.totalorder %s21, 0
      %s24 = sadd.s32 %s23, 1
      %s25 = scalar_select %p22, %s23, %s24
      %p28 = pneg %p22
      %p29 = scmp.eq.s32.totalorder %s13, 1
      %p30 = por %p28, %p29
      %p31 = scmp.ne.s32.totalorder %s23, %s26
      %p32 = scmp.eq.s32.totalorder %s13, 0
      %p33 = por %p31, %p32
      %p34 = scmp.ne.s32.totalorder %s23, %s26
      %p35 = scmp.eq.s32.totalorder %s18, 1
      %p36 = por %p34, %p35
      %p37 = scmp.ne.s32.totalorder %s26, %s27
      %p38 = scmp.eq.s32.totalorder %s18, 0
      %p39 = por %p37, %p38
      %p40 = scmp.ne.s32.totalorder %s26, %s27
      %p41 = scmp.eq.s32.totalorder %s19, 1
      %p42 = por %p40, %p41
      %p44 = scmp.ne.s32.totalorder %s27, %s43
      %p45 = scmp.eq.s32.totalorder %s19, 0
      %p46 = por %p44, %p45
      %s48 = sadd.s32 %s47, 1
      %p51 = scmp.eq.s32.totalorder %s13, 1
      %p52 = scmp.ne.s32.totalorder %s47, %s49
      %p53 = scmp.eq.s32.totalorder %s13, 0
      %p54 = por %p52, %p53
      %p55 = scmp.ne.s32.totalorder %s47, %s49
      %p56 = scmp.eq.s32.totalorder %s18, 1
      %p57 = por %p55, %p56
      %p58 = scmp.ne.s32.totalorder %s49, %s50
      %p59 = scmp.eq.s32.totalorder %s18, 0
      %p60 = por %p58, %p59
      %p61 = scmp.ne.s32.totalorder %s49, %s50
      %p62 = scmp.eq.s32.totalorder %s19, 1
      %p63 = por %p61, %p62
      %p65 = scmp.ne.s32.totalorder %s50, %s64
      %p66 = scmp.eq.s32.totalorder %s19, 0
      %p67 = por %p65, %p66
      %s69 = sadd.s32 %s68, 1
      %p72 = scmp.eq.s32.totalorder %s13, 1
      %p73 = scmp.ne.s32.totalorder %s68, %s70
      %p74 = scmp.eq.s32.totalorder %s13, 0
      %p75 = por %p73, %p74
      %p76 = scmp.ne.s32.totalorder %s68, %s70
      %p77 = scmp.eq.s32.totalorder %s18, 1
      %p78 = por %p76, %p77
      %p79 = scmp.ne.s32.totalorder %s70, %s71
      %p80 = scmp.eq.s32.totalorder %s18, 0
      %p81 = por %p79, %p80
      %p82 = scmp.ne.s32.totalorder %s70, %s71
      %p83 = scmp.eq.s32.totalorder %s19, 1
      %p84 = por %p82, %p83
      %p86 = scmp.ne.s32.totalorder %s71, %s85
      %p87 = scmp.eq.s32.totalorder %s19, 0
      %p88 = por %p86, %p87
      %s90 = sadd.s32 %s89, 1
      %p93 = scmp.eq.s32.totalorder %s13, 1
      %p94 = scmp.ne.s32.totalorder %s89, %s91
      %p95 = scmp.eq.s32.totalorder %s13, 0
      %p96 = por %p94, %p95
      %p97 = scmp.ne.s32.totalorder %s89, %s91
      %p98 = scmp.eq.s32.totalorder %s18, 1
      %p99 = por %p97, %p98
      %p100 = scmp.ne.s32.totalorder %s91, %s92
      %p101 = scmp.eq.s32.totalorder %s18, 0
      %p102 = por %p100, %p101
      %p103 = scmp.ne.s32.totalorder %s91, %s92
      %p104 = scmp.eq.s32.totalorder %s19, 1
      %p105 = por %p103, %p104
      %p107 = scmp.ne.s32.totalorder %s92, %s106
      %p108 = scmp.eq.s32.totalorder %s19, 0
      %p109 = por %p107, %p108
      %s110 = ssub.s32 %s13, %s20
      %p111 = scmp.eq.s32.totalorder %s110, 0
      %s113 = sadd.s32 %s112, 1
      %s114 = scalar_select %p111, %s112, %s113
      %p117 = pneg %p111
      %p118 = scmp.eq.s32.totalorder %s13, 1
      %p119 = por %p117, %p118
      %p120 = scmp.ne.s32.totalorder %s112, %s115
      %p121 = scmp.eq.s32.totalorder %s13, 0
      %p122 = por %p120, %p121
      %p123 = scmp.ne.s32.totalorder %s112, %s115
      %p124 = scmp.eq.s32.totalorder %s18, 1
      %p125 = por %p123, %p124
      %p126 = scmp.ne.s32.totalorder %s115, %s116
      %p127 = scmp.eq.s32.totalorder %s18, 0
      %p128 = por %p126, %p127
      %p129 = scmp.ne.s32.totalorder %s115, %s116
      %p130 = scmp.eq.s32.totalorder %s19, 1
      %p131 = por %p129, %p130
      %p133 = scmp.ne.s32.totalorder %s116, %s132
      %p134 = scmp.eq.s32.totalorder %s19, 0
      %p135 = por %p133, %p134
      %s137 = sadd.s32 %s136, 1
      %p140 = scmp.eq.s32.totalorder %s13, 1
      %p141 = scmp.ne.s32.totalorder %s136, %s138
      %p142 = scmp.eq.s32.totalorder %s13, 0
      %p143 = por %p141, %p142
      %p144 = scmp.ne.s32.totalorder %s136, %s138
      %p145 = scmp.eq.s32.totalorder %s18, 1
      %p146 = por %p144, %p145
      %p147 = scmp.ne.s32.totalorder %s138, %s139
      %p148 = scmp.eq.s32.totalorder %s18, 0
      %p149 = por %p147, %p148
      %p150 = scmp.ne.s32.totalorder %s138, %s139
      %p151 = scmp.eq.s32.totalorder %s19, 1
      %p152 = por %p150, %p151
      %p154 = scmp.ne.s32.totalorder %s139, %s153
      %p155 = scmp.eq.s32.totalorder %s19, 0
      %p156 = por %p154, %p155
      %s158 = sadd.s32 %s157, 1
      %p161 = scmp.eq.s32.totalorder %s13, 1
      %p162 = scmp.ne.s32.totalorder %s157, %s159
      %p163 = scmp.eq.s32.totalorder %s13, 0
      %p164 = por %p162, %p163
      %p165 = scmp.ne.s32.totalorder %s157, %s159
      %p166 = scmp.eq.s32.totalorder %s18, 1
      %p167 = por %p165, %p166
      %p168 = scmp.ne.s32.totalorder %s159, %s160
      %p169 = scmp.eq.s32.totalorder %s18, 0
      %p170 = por %p168, %p169
      %p171 = scmp.ne.s32.totalorder %s159, %s160
      %p172 = scmp.eq.s32.totalorder %s19, 1
      %p173 = por %p171, %p172
      %p175 = scmp.ne.s32.totalorder %s160, %s174
      %p176 = scmp.eq.s32.totalorder %s19, 0
      %p177 = por %p175, %p176
      %p178 = scmp.le.s32.totalorder 1, %s13
      %p179 = scmp.lt.s32.totalorder %s13, 3
      %p180 = pnand %p178, %p179
      %p181 = pneg %p180
      // Predicated region
      $region9: #{upsample_forward.2} parent=5 // pred_check
        _
      $region10: #{upsample_forward.2} parent=5 // pred_check_branch
        %183 = sbr.rel (%p180) target = $region12
      $region11: #{upsample_forward.2} parent=5 // pred_region
        %s184 = ssub.s32 %s13, 1
        // Predicated region
        $region13: #{upsample_forward.2} parent=11 // pred_check
          %p185 = pneg %p60
        $region14: #{upsample_forward.2} parent=11 // pred_check_branch
          %187 = sbr.rel (%p185) target = $region16
        $region15: #{upsample_forward.2} parent=11 // pred_region
          _
        $region16: #{upsample_forward.2} parent=11 // pred_fallthru
          _
        // Predicated region
        $region17: #{upsample_forward.2} parent=11 // pred_check
          %p188 = pneg %p81
        $region18: #{upsample_forward.2} parent=11 // pred_check_branch
          %190 = sbr.rel (%p188) target = $region20
        $region19: #{upsample_forward.2} parent=11 // pred_region
          _
        $region20: #{upsample_forward.2} parent=11 // pred_fallthru
          _
        // Predicated region
        $region21: #{upsample_forward.2} parent=11 // pred_check
          %p191 = pneg %p102
        $region22: #{upsample_forward.2} parent=11 // pred_check_branch
          %193 = sbr.rel (%p191) target = $region24
        $region23: #{upsample_forward.2} parent=11 // pred_region
          _
        $region24: #{upsample_forward.2} parent=11 // pred_fallthru
          _
      $region12: #{upsample_forward.2} parent=5 // pred_fallthru
        _
      %p194 = scmp.lt.s32.totalorder %s13, 2
      // Predicated region
      $region25: #{upsample_forward.2} parent=5 // pred_check
        %p195 = pneg %p194
      $region26: #{upsample_forward.2} parent=5 // pred_check_branch
        %197 = sbr.rel (%p195) target = $region28
      $region27: #{upsample_forward.2} parent=5 // pred_region
        // Predicated region
        $region29: #{upsample_forward.2} parent=27 // pred_check
          %p198 = pneg %p33
        $region30: #{upsample_forward.2} parent=27 // pred_check_branch
          %200 = sbr.rel (%p198) target = $region32
        $region31: #{upsample_forward.2} parent=27 // pred_region
          %s201 = sand.u32 %s23, 1
          %s202 = sand.u32 %s23, 1
          %s203 = smul.addr %s202, 40
          %s204 = scalar_lea.vmem [#allocation4], %s203
          %s205 = smul.u32 2, %s13
          %s206 = smul.addr %s205, 4
          %s207 = scalar_lea.vmem %s0, %s206
          // Predicated region
          $region33: #{upsample_forward.2} parent=31 // pred_check
            _
          $region34: #{upsample_forward.2} parent=31 // pred_check_branch
            %209 = sbr.rel (0) target = $region36
          $region35: #{upsample_forward.2} parent=31 // pred_region
            // Predicated region
            $region37: #{upsample_forward.2} parent=35 // pred_check
              _
            $region38: #{upsample_forward.2} parent=35 // pred_check_branch
              %211 = sbr.rel (0) target = $region40
            $region39: #{upsample_forward.2} parent=35 // pred_region
              // Predicated region
              $region52: #{upsample_forward.2} parent=39 // pred_check
                _
              $region53: #{upsample_forward.2} parent=39 // pred_check_branch
                %235 = sbr.rel (0) target = $region55
              $region54: #{upsample_forward.2} parent=39 // pred_region
                loop: start=0, step=1, limit=1
                $region56: #{upsample_forward.2} parent=54 // loop_pre_header
                  _
                $region57: #{upsample_forward.2} parent=54 // loop_header
                  %s237 = sphi 0, %s241
                  %p238 = scmp.ge.s32.totalorder %s237, 1
                  %s242 = sphi %s207, %s207
                  %s243 = sphi %s204, %s204
                $region58: #{upsample_forward.2} parent=54 // loop_header_branch
                  %240 = sbr.rel (%p238) target = $region62
                $region59: #{upsample_forward.2} parent=54 // loop_body
                  %v244 = vld [vmem:[%s242] sm:$0xff]
                  %245 = vst [vmem:[%s243] sm:$0xff] %v244
                  %v246 = vld [vmem:[%s242 + $0x10] sm:$0xff]
                  %247 = vst [vmem:[%s243 + $0x8] sm:$0xff] %v246
                  %v248 = vld [vmem:[%s242 + $0x20] sm:$0xff]
                  %249 = vst [vmem:[%s243 + $0x10] sm:$0xff] %v248
                  %v250 = vld [vmem:[%s242 + $0x30] sm:$0xff]
                  %251 = vst [vmem:[%s243 + $0x18] sm:$0xff] %v250
                  %v252 = vld [vmem:[%s242 + $0x40] sm:$0xff]
                  %253 = vst [vmem:[%s243 + $0x20] sm:$0xff] %v252
                $region60: #{upsample_forward.2} parent=54 // loop_footer
                  %s241 = sadd.s32 1, %s237
                $region61: #{upsample_forward.2} parent=54 // loop_footer_branch
                  %236 = sbr.rel target = $region57
                $region62: #{upsample_forward.2} parent=54 // loop_exit
                  _
              $region55: #{upsample_forward.2} parent=39 // pred_fallthru
                _
              // Predicated region
              $region63: #{upsample_forward.2} parent=39 // pred_check
                _
              $region64: #{upsample_forward.2} parent=39 // pred_check_branch
                %255 = sbr.rel target = $region66
              $region65: #{upsample_forward.2} parent=39 // pred_region
                _
              $region66: #{upsample_forward.2} parent=39 // pred_fallthru
                _
            $region40: #{upsample_forward.2} parent=35 // pred_fallthru
              _
            // Predicated region
            $region41: #{upsample_forward.2} parent=35 // pred_check
              _
            $region42: #{upsample_forward.2} parent=35 // pred_check_branch
              %213 = sbr.rel target = $region44
            $region43: #{upsample_forward.2} parent=35 // pred_region
              %s215 = ssub.s32 256, 1
              loop: start=0, step=1, limit=1
              $region45: #{upsample_forward.2} parent=43 // loop_pre_header
                _
              $region46: #{upsample_forward.2} parent=43 // loop_header
                %s217 = sphi 0, %s221
                %p218 = scmp.ge.s32.totalorder %s217, 1
                %s222 = sphi %s207, %s207
                %s223 = sphi %s204, %s204
              $region47: #{upsample_forward.2} parent=43 // loop_header_branch
                %220 = sbr.rel (%p218) target = $region51
              $region48: #{upsample_forward.2} parent=43 // loop_body
                %v224 = vld [vmem:[%s222] sm:%s215]
                %225 = vst [vmem:[%s223] sm:%s215] %v224
                %v226 = vld [vmem:[%s222 + $0x10] sm:%s215]
                %227 = vst [vmem:[%s223 + $0x8] sm:%s215] %v226
                %v228 = vld [vmem:[%s222 + $0x20] sm:%s215]
                %229 = vst [vmem:[%s223 + $0x10] sm:%s215] %v228
                %v230 = vld [vmem:[%s222 + $0x30] sm:%s215]
                %231 = vst [vmem:[%s223 + $0x18] sm:%s215] %v230
                %v232 = vld [vmem:[%s222 + $0x40] sm:%s215]
                %233 = vst [vmem:[%s223 + $0x20] sm:%s215] %v232
              $region49: #{upsample_forward.2} parent=43 // loop_footer
                %s221 = sadd.s32 1, %s217
              $region50: #{upsample_forward.2} parent=43 // loop_footer_branch
                %216 = sbr.rel target = $region46
              $region51: #{upsample_forward.2} parent=43 // loop_exit
                _
            $region44: #{upsample_forward.2} parent=35 // pred_fallthru
              _
          $region36: #{upsample_forward.2} parent=31 // pred_fallthru
            _
          %256 = vnop
        $region32: #{upsample_forward.2} parent=27 // pred_fallthru
          _
      $region28: #{upsample_forward.2} parent=5 // pred_fallthru
        _
      %p257 = scmp.le.s32.totalorder 1, %s13
      %p258 = scmp.lt.s32.totalorder %s13, 3
      %p259 = pnand %p257, %p258
      %p260 = pneg %p259
      // Predicated region
      $region67: #{upsample_forward.2} parent=5 // pred_check
        _
      $region68: #{upsample_forward.2} parent=5 // pred_check_branch
        %262 = sbr.rel (%p259) target = $region70
      $region69: #{upsample_forward.2} parent=5 // pred_region
        %s263 = ssub.s32 %s13, 1
        %s264 = sand.u32 %s26, 1
        %s265 = sand.u32 %s26, 1
        %s266 = smul.addr %s265, 40
        %s267 = scalar_lea.vmem [#allocation4], %s266
        // Predicated region
        $region71: #{upsample_forward.2} parent=69 // pred_check
          %p268 = pneg %p39
        $region72: #{upsample_forward.2} parent=69 // pred_check_branch
          %270 = sbr.rel (%p268) target = $region74
        $region73: #{upsample_forward.2} parent=69 // pred_region
          _
        $region74: #{upsample_forward.2} parent=69 // pred_fallthru
          _
        %s271 = sand.u32 %s26, 1
        %s272 = sand.u32 %s26, 1
        %s273 = smul.addr %s272, 40
        %s274 = scalar_lea.vmem [#allocation4], %s273
        %p275 = pneg %p39
        %p276 = pneg %p36
        %p277 = pneg %p60
        %p278 = pneg %p57
        %p279 = pneg %p81
        %p280 = pneg %p78
        %p281 = pneg %p102
        %p282 = pneg %p99
        %p283 = pneg %p128
        %p284 = pneg %p125
        %s285 = smul.u32 2, %s18
        %p286 = scmp.lt.s32.totalorder %s285, 3
        %s287 = scalar_select %p286, %s285, 3
        %s288 = smul.addr %s287, 8
        %s289 = scalar_lea.vmem %s4, %s288
        %p290 = pneg %p149
        %p291 = pneg %p146
        %p292 = pneg %p170
        %p293 = pneg %p167
        %s294 = smul.u32 2, %s18
        %s295 = smul.u32 2, %s18
        %p296 = scmp.lt.s32.totalorder %s295, 3
        %s297 = scalar_select %p296, %s295, 3
        %s298 = smul.addr %s297, 8
        %s299 = scalar_lea.vmem %s4, %s298
        %s300 = smul.u32 2, %s18
        %p302 = scmp.eq.s32.totalorder %s18, 0
        // Predicated region
        $region75: #{upsample_forward.2} parent=69 // pred_check
          %p303 = pneg %p302
        $region76: #{upsample_forward.2} parent=69 // pred_check_branch
          %305 = sbr.rel (%p303) target = $region78
        $region77: #{upsample_forward.2} parent=69 // pred_region
          %vm306 = vcmask 7168
          %307 = vst.msk [vmem:[#allocation2] sm:$0xff] %vm306, 0.0
          %308 = vst.msk [vmem:[#allocation3] sm:$0xff] %vm306, 0.0
        $region78: #{upsample_forward.2} parent=69 // pred_fallthru
          _
        %v309 = vld [vmem:[%s1] sm:$0xf]
        %v310 = vld [vmem:[%s267] sm:$0xff]
        %v311 = vld [vmem:[%s267 + $0x8] sm:$0xff]
        %v312 = vld [vmem:[%s267 + $0x10] sm:$0xff]
        %v313 = vld [vmem:[%s267 + $0x18] sm:$0xff]
        %v314 = vld [vmem:[%s267 + $0x20] sm:$0x33]
        %v320 = vunpack.c.l.b16 %v310
        %v321 = vunpack.c.h.b16 %v310
        %v322 = vunpack.c.l.b16 %v311
        %v323 = vunpack.c.h.b16 %v311
        %v324 = vunpack.c.l.b16 %v312
        %v325 = vunpack.c.h.b16 %v312
        %v326 = vunpack.c.l.b16 %v313
        %v327 = vunpack.c.h.b16 %v313
        %v328 = vunpack.c.l.b16 %v314
        %v329 = vunpack.c.h.b16 %v314
        %v330 = vpack.c.b16 %v322, %v320
        %v331 = vpack.c.b16 %v323, %v321
        %v332 = vpack.c.b16 %v326, %v324
        %v333 = vpack.c.b16 %v327, %v325
        %v334 = vpack.c.b16 %v328, %v328
        %v335 = vpack.c.b16 %v329, %v329
        %vm340 = vcmask 293888
        %v342 = vsel %vm340, %v309, 0
        %vm344 = vcmask 1041408
        %v346 = vsel %vm344, %v334, 0
        %v349 = vsel %vm344, %v335, 0
        %351 = vmatprep.subr.bf16.mxu0 0
        %352 = vmatpush1.bf16.msra.mxu0 0
        %353 = vmatprep.subr.bf16.mxu0 0
        %354 = vmatpush1.bf16.msra.mxu0 0
        %355 = vmatprep.subr.bf16.mxu0 0
        %356 = vmatpush1.bf16.msra.mxu0 0
        %357 = vmatprep.subr.bf16.mxu0 0
        %358 = vmatpush1.bf16.msra.mxu0 0
        %359 = vmatprep.subr.bf16.mxu0 0
        %360 = vmatpush1.bf16.msra.mxu0 0
        %361 = vmatprep.subr.bf16.mxu0 %v349
        %362 = vmatpush1.bf16.msra.mxu0 %v346
        %363 = vmatprep.subr.bf16.mxu0 %v333
        %364 = vmatpush1.bf16.msra.mxu0 %v332
        %365 = vmatprep.subr.bf16.mxu0 %v331
        %366 = vmatpush1.bf16.msra.mxu0 %v330
        %367 = vmatprep.subr.bf16.mxu0 0
        %368 = vmatpush2.bf16.msra.mxu0 0
        %369 = vmatprep.subr.bf16.mxu0 0
        %370 = vmatpush2.bf16.msra.mxu0 0
        %371 = vmatprep.subr.bf16.mxu0 0
        %372 = vmatpush2.bf16.msra.mxu0 0
        %373 = vmatprep.subr.bf16.mxu0 0
        %374 = vmatpush2.bf16.msra.mxu0 0
        %375 = vmatprep.subr.bf16.mxu0 0
        %376 = vmatpush2.bf16.msra.mxu0 0
        %377 = vmatprep.subr.bf16.mxu0 0
        %378 = vmatpush2.bf16.msra.mxu0 0
        %379 = vmatprep.subr.bf16.mxu0 0
        %380 = vmatpush2.bf16.msra.mxu0 0
        %381 = vmatprep.subr.bf16.mxu0 0
        %382 = vmatpush2.bf16.msra.mxu0 0
        %383 = vmatprep.mubr.bf16.mxu0 0
        %384 = vmatmul.mubr.bf16.gmra.mxu0 %v342
        %v385 = vpop.f32.mrf.mxu0
        %v386 = vadd.f32 0.0, %v385
        %v387 = vpop.f32.mrf.mxu0
        %v388 = vadd.f32 0.0, %v387
        %v389 = vpop.f32.mrf.mxu0
        %v390 = vpop.f32.mrf.mxu0
        %391 = vdwg.mxu0
        %392 = vst [vmem:[%s299] sm:$0xff] %v386
        %393 = vst [vmem:[%s299 + $0x8] sm:$0xff] %v388
        %v394 = vld [vmem:[#allocation2] sm:$0xff]
        %v395 = vadd.f32 %v386, %v388
        %396 = vadd.xlane.f32.xlu0 %v395
        %v397 = vpop.xlane.xlu0 %396
        %v398 = vadd.f32 %v394, %v397
        %vm399 = vcmask 7168
        %400 = vst.msk [vmem:[#allocation2] sm:$0xff] %vm399, %v398
        %v401 = vld [vmem:[#allocation3] sm:$0xff]
        %v402 = vmul.f32 %v386, %v386
        %v403 = vmul.f32 %v388, %v388
        %v404 = vadd.f32 %v402, %v403
        %405 = vadd.xlane.f32.xlu0 %v404
        %v406 = vpop.xlane.xlu0 %405
        %v407 = vadd.f32 %v401, %v406
        %408 = vst.msk [vmem:[#allocation3] sm:$0xff] %vm399, %v407
        %p409 = scmp.eq.s32.totalorder %s18, 1
        // Predicated region
        $region79: #{upsample_forward.2} parent=69 // pred_check
          %p410 = pneg %p409
        $region80: #{upsample_forward.2} parent=69 // pred_check_branch
          %412 = sbr.rel (%p410) target = $region82
        $region81: #{upsample_forward.2} parent=69 // pred_region
          %v413 = vld [vmem:[#allocation2] sm:$0xff]
          %v414 = vmul.f32 %v413, 0.001953125
          %v415 = vld [vmem:[#allocation3] sm:$0xff]
          %v416 = vmul.f32 %v415, 0.001953125
          %v417 = vmul.f32 %v414, %v414
          %v418 = vsub.f32 %v416, %v417
          %v419 = vld [vmem:[%s2] sm:$0xff]
          %v420 = vadd.f32 %v418, 1e-05
          %v421 = vrsqrt.pop %v420
          %v422 = vmul.f32 %v419, %v421
          %423 = vst.msk [vmem:[%s5] sm:$0xff] %vm399, %v422
          %v424 = vld [vmem:[%s3] sm:$0xff]
          %v425 = vmul.f32 %v414, %v422
          %v426 = vsub.f32 %v424, %v425
          %427 = vst.msk [vmem:[%s6] sm:$0xff] %vm399, %v426
        $region82: #{upsample_forward.2} parent=69 // pred_fallthru
          _
        %s428 = smul.u32 2, %s18
        %p429 = scmp.lt.s32.totalorder %s428, 3
        %s430 = scalar_select %p429, %s428, 3
        %s431 = smul.addr %s430, 8
        %s432 = scalar_lea.vmem %s4, %s431
        // Predicated region
        $region83: #{upsample_forward.2} parent=69 // pred_check
          %p433 = pneg %p125
        $region84: #{upsample_forward.2} parent=69 // pred_check_branch
          %435 = sbr.rel (%p433) target = $region86
        $region85: #{upsample_forward.2} parent=69 // pred_region
          %s436 = smul.u32 2, %s18
        $region86: #{upsample_forward.2} parent=69 // pred_fallthru
          _
        // Predicated region
        $region87: #{upsample_forward.2} parent=69 // pred_check
          %p437 = pneg %p146
        $region88: #{upsample_forward.2} parent=69 // pred_check_branch
          %439 = sbr.rel (%p437) target = $region90
        $region89: #{upsample_forward.2} parent=69 // pred_region
          _
        $region90: #{upsample_forward.2} parent=69 // pred_fallthru
          _
        // Predicated region
        $region91: #{upsample_forward.2} parent=69 // pred_check
          %p440 = pneg %p167
        $region92: #{upsample_forward.2} parent=69 // pred_check_branch
          %442 = sbr.rel (%p440) target = $region94
        $region93: #{upsample_forward.2} parent=69 // pred_region
          _
        $region94: #{upsample_forward.2} parent=69 // pred_fallthru
          _
        // Predicated region
        $region95: #{upsample_forward.2} parent=69 // pred_check
          %p443 = pneg %p146
        $region96: #{upsample_forward.2} parent=69 // pred_check_branch
          %445 = sbr.rel (%p443) target = $region98
        $region97: #{upsample_forward.2} parent=69 // pred_region
          _
        $region98: #{upsample_forward.2} parent=69 // pred_fallthru
          _
        // Predicated region
        $region99: #{upsample_forward.2} parent=69 // pred_check
          %p446 = pneg %p167
        $region100: #{upsample_forward.2} parent=69 // pred_check_branch
          %448 = sbr.rel (%p446) target = $region102
        $region101: #{upsample_forward.2} parent=69 // pred_region
          _
        $region102: #{upsample_forward.2} parent=69 // pred_fallthru
          _
      $region70: #{upsample_forward.2} parent=5 // pred_fallthru
        _
      %p449 = scmp.le.s32.totalorder 2, %s13
      // Predicated region
      $region103: #{upsample_forward.2} parent=5 // pred_check
        %p450 = pneg %p449
      $region104: #{upsample_forward.2} parent=5 // pred_check_branch
        %452 = sbr.rel (%p450) target = $region106
      $region105: #{upsample_forward.2} parent=5 // pred_region
        %s453 = ssub.s32 %s13, 2
        // Predicated region
        $region107: #{upsample_forward.2} parent=105 // pred_check
          %p454 = pneg %p131
        $region108: #{upsample_forward.2} parent=105 // pred_check_branch
          %456 = sbr.rel (%p454) target = $region110
        $region109: #{upsample_forward.2} parent=105 // pred_region
          %s457 = smul.u32 2, %s19
          %p458 = scmp.lt.s32.totalorder %s457, 3
          %s459 = scalar_select %p458, %s457, 3
          %s460 = smul.addr %s459, 8
          %s461 = scalar_lea.vmem %s4, %s460
        $region110: #{upsample_forward.2} parent=105 // pred_fallthru
          _
      $region106: #{upsample_forward.2} parent=5 // pred_fallthru
        _
    $region6: #{upsample_forward.2} parent=1 // loop_footer
      %s17 = sadd.s32 1, %s13
    $region7: #{upsample_forward.2} parent=1 // loop_footer_branch
      %12 = sbr.rel target = $region3
    $region8: #{upsample_forward.2} parent=1 // loop_exit
      _

// kernel: upsample_forward.3
$region0: #{upsample_forward.3}
  #allocation0 [shape = 'u32[]', space=smem, size = 0x4, offset = 0x4, fixed_abs, tag = 'smem constant byte address 0x4 - core index']
  #allocation1 [shape = 'u32[144,128]{1,0:T(1,128)}', space=vmem, size = 0x12000, scoped, tag = 'internal scratch']
  %s0 = inlined_call_operand.vmem [shape: f32[32,512], index: 0, kind: input, shape index: {}]
  %s1 = inlined_call_operand.vmem [shape: f32[1,512], index: 1, kind: input, shape index: {}]
  %s2 = inlined_call_operand.vmem [shape: f32[1,512], index: 2, kind: input, shape index: {}]
  %s3 = inlined_call_operand.vmem [shape: f32[8,1], index: 3, kind: input, shape index: {}]
  %s4 = inlined_call_operand.vmem [shape: f32[8,1], index: 4, kind: input, shape index: {}]
  %s5 = inlined_call_operand.vmem [shape: bf16[32,32], index: 5, kind: input, shape index: {}]
  %s6 = inlined_call_operand.vmem [shape: f32[32,512], index: 6, kind: output, shape index: {}]
  %s7 = sld [smem:[#allocation0]]
  $region99: #{upsample_forward.3} parent=0
    _
  %s9 = ssub.s32 1, %s7
  %s10 = scalar_select 0, %s9, %s7
  $region1: #{upsample_forward.3} parent=0
    #allocation2 [shape = 'u8[65536]{0}', space=vmem, size = 0x10000, scoped, tag = 'input window, operand 0']
    #allocation3 [shape = 'u8[65536]{0}', space=vmem, size = 0x10000, scoped, tag = 'output window, operand 0']
    loop: start=0, step=1, limit=4
    $region2: #{upsample_forward.3} parent=1 // loop_pre_header
      _
    $region3: #{upsample_forward.3} parent=1 // loop_header
      %s12 = sphi 0, %s16
      %p13 = scmp.ge.s32.totalorder %s12, 4
      %s22 = sphi 0, %s24
      %s25 = sphi 0, %s22
      %s26 = sphi 0, %s25
      %s42 = sphi 0, %s26
      %s48 = sphi 0, %s50
      %s51 = sphi 0, %s48
      %s52 = sphi 0, %s51
      %s68 = sphi 0, %s52
      %s74 = sphi 0, %s76
      %s77 = sphi 0, %s74
      %s78 = sphi 0, %s77
      %s94 = sphi 0, %s78
      %s98 = sphi 0, %s98
      %s100 = sphi 0, %s98
      %s101 = sphi 0, %s100
      %s115 = sphi 0, %s101
      %s119 = sphi 0, %s119
      %s121 = sphi 0, %s119
      %s122 = sphi 0, %s121
      %s136 = sphi 0, %s122
      %s140 = sphi 0, %s140
      %s142 = sphi 0, %s140
      %s143 = sphi 0, %s142
      %s157 = sphi 0, %s143
      %s163 = sphi 0, %s165
      %s166 = sphi 0, %s163
      %s167 = sphi 0, %s166
      %s183 = sphi 0, %s167
    $region4: #{upsample_forward.3} parent=1 // loop_header_branch
      %15 = sbr.rel (%p13) target = $region8
    $region5: #{upsample_forward.3} parent=1 // loop_body
      %s17 = ssub.s32 %s12, 1
      %s18 = ssub.s32 %s12, 2
      %s19 = sadd.s32 %s12, 1
      %s20 = ssub.s32 %s12, %s19
      %p21 = scmp.eq.s32.totalorder %s20, 0
      %s23 = sadd.s32 %s22, 1
      %s24 = scalar_select %p21, %s22, %s23
      %p27 = pneg %p21
      %p28 = scmp.eq.s32.totalorder %s12, 1
      %p29 = por %p27, %p28
      %p30 = scmp.ne.s32.totalorder %s22, %s25
      %p31 = scmp.eq.s32.totalorder %s12, 0
      %p32 = por %p30, %p31
      %p33 = scmp.ne.s32.totalorder %s22, %s25
      %p34 = scmp.eq.s32.totalorder %s17, 1
      %p35 = por %p33, %p34
      %p36 = scmp.ne.s32.totalorder %s25, %s26
      %p37 = scmp.eq.s32.totalorder %s17, 0
      %p38 = por %p36, %p37
      %p39 = scmp.ne.s32.totalorder %s25, %s26
      %p40 = scmp.eq.s32.totalorder %s18, 1
      %p41 = por %p39, %p40
      %p43 = scmp.ne.s32.totalorder %s26, %s42
      %p44 = scmp.eq.s32.totalorder %s18, 0
      %p45 = por %p43, %p44
      %s46 = ssub.s32 %s12, %s19
      %p47 = scmp.eq.s32.totalorder %s46, 0
      %s49 = sadd.s32 %s48, 1
      %s50 = scalar_select %p47, %s48, %s49
      %p53 = pneg %p47
      %p54 = scmp.eq.s32.totalorder %s12, 1
      %p55 = por %p53, %p54
      %p56 = scmp.ne.s32.totalorder %s48, %s51
      %p57 = scmp.eq.s32.totalorder %s12, 0
      %p58 = por %p56, %p57
      %p59 = scmp.ne.s32.totalorder %s48, %s51
      %p60 = scmp.eq.s32.totalorder %s17, 1
      %p61 = por %p59, %p60
      %p62 = scmp.ne.s32.totalorder %s51, %s52
      %p63 = scmp.eq.s32.totalorder %s17, 0
      %p64 = por %p62, %p63
      %p65 = scmp.ne.s32.totalorder %s51, %s52
      %p66 = scmp.eq.s32.totalorder %s18, 1
      %p67 = por %p65, %p66
      %p69 = scmp.ne.s32.totalorder %s52, %s68
      %p70 = scmp.eq.s32.totalorder %s18, 0
      %p71 = por %p69, %p70
      %s72 = ssub.s32 %s12, %s19
      %p73 = scmp.eq.s32.totalorder %s72, 0
      %s75 = sadd.s32 %s74, 1
      %s76 = scalar_select %p73, %s74, %s75
      %p79 = pneg %p73
      %p80 = scmp.eq.s32.totalorder %s12, 1
      %p81 = por %p79, %p80
      %p82 = scmp.ne.s32.totalorder %s74, %s77
      %p83 = scmp.eq.s32.totalorder %s12, 0
      %p84 = por %p82, %p83
      %p85 = scmp.ne.s32.totalorder %s74, %s77
      %p86 = scmp.eq.s32.totalorder %s17, 1
      %p87 = por %p85, %p86
      %p88 = scmp.ne.s32.totalorder %s77, %s78
      %p89 = scmp.eq.s32.totalorder %s17, 0
      %p90 = por %p88, %p89
      %p91 = scmp.ne.s32.totalorder %s77, %s78
      %p92 = scmp.eq.s32.totalorder %s18, 1
      %p93 = por %p91, %p92
      %p95 = scmp.ne.s32.totalorder %s78, %s94
      %p96 = scmp.eq.s32.totalorder %s18, 0
      %p97 = por %p95, %p96
      %s99 = sadd.s32 %s98, 1
      %p102 = scmp.eq.s32.totalorder %s12, 1
      %p103 = scmp.ne.s32.totalorder %s98, %s100
      %p104 = scmp.eq.s32.totalorder %s12, 0
      %p105 = por %p103, %p104
      %p106 = scmp.ne.s32.totalorder %s98, %s100
      %p107 = scmp.eq.s32.totalorder %s17, 1
      %p108 = por %p106, %p107
      %p109 = scmp.ne.s32.totalorder %s100, %s101
      %p110 = scmp.eq.s32.totalorder %s17, 0
      %p111 = por %p109, %p110
      %p112 = scmp.ne.s32.totalorder %s100, %s101
      %p113 = scmp.eq.s32.totalorder %s18, 1
      %p114 = por %p112, %p113
      %p116 = scmp.ne.s32.totalorder %s101, %s115
      %p117 = scmp.eq.s32.totalorder %s18, 0
      %p118 = por %p116, %p117
      %s120 = sadd.s32 %s119, 1
      %p123 = scmp.eq.s32.totalorder %s12, 1
      %p124 = scmp.ne.s32.totalorder %s119, %s121
      %p125 = scmp.eq.s32.totalorder %s12, 0
      %p126 = por %p124, %p125
      %p127 = scmp.ne.s32.totalorder %s119, %s121
      %p128 = scmp.eq.s32.totalorder %s17, 1
      %p129 = por %p127, %p128
      %p130 = scmp.ne.s32.totalorder %s121, %s122
      %p131 = scmp.eq.s32.totalorder %s17, 0
      %p132 = por %p130, %p131
      %p133 = scmp.ne.s32.totalorder %s121, %s122
      %p134 = scmp.eq.s32.totalorder %s18, 1
      %p135 = por %p133, %p134
      %p137 = scmp.ne.s32.totalorder %s122, %s136
      %p138 = scmp.eq.s32.totalorder %s18, 0
      %p139 = por %p137, %p138
      %s141 = sadd.s32 %s140, 1
      %p144 = scmp.eq.s32.totalorder %s12, 1
      %p145 = scmp.ne.s32.totalorder %s140, %s142
      %p146 = scmp.eq.s32.totalorder %s12, 0
      %p147 = por %p145, %p146
      %p148 = scmp.ne.s32.totalorder %s140, %s142
      %p149 = scmp.eq.s32.totalorder %s17, 1
      %p150 = por %p148, %p149
      %p151 = scmp.ne.s32.totalorder %s142, %s143
      %p152 = scmp.eq.s32.totalorder %s17, 0
      %p153 = por %p151, %p152
      %p154 = scmp.ne.s32.totalorder %s142, %s143
      %p155 = scmp.eq.s32.totalorder %s18, 1
      %p156 = por %p154, %p155
      %p158 = scmp.ne.s32.totalorder %s143, %s157
      %p159 = scmp.eq.s32.totalorder %s18, 0
      %p160 = por %p158, %p159
      %s161 = ssub.s32 %s12, %s19
      %p162 = scmp.eq.s32.totalorder %s161, 0
      %s164 = sadd.s32 %s163, 1
      %s165 = scalar_select %p162, %s163, %s164
      %p168 = pneg %p162
      %p169 = scmp.eq.s32.totalorder %s12, 1
      %p170 = por %p168, %p169
      %p171 = scmp.ne.s32.totalorder %s163, %s166
      %p172 = scmp.eq.s32.totalorder %s12, 0
      %p173 = por %p171, %p172
      %p174 = scmp.ne.s32.totalorder %s163, %s166
      %p175 = scmp.eq.s32.totalorder %s17, 1
      %p176 = por %p174, %p175
      %p177 = scmp.ne.s32.totalorder %s166, %s167
      %p178 = scmp.eq.s32.totalorder %s17, 0
      %p179 = por %p177, %p178
      %p180 = scmp.ne.s32.totalorder %s166, %s167
      %p181 = scmp.eq.s32.totalorder %s18, 1
      %p182 = por %p180, %p181
      %p184 = scmp.ne.s32.totalorder %s167, %s183
      %p185 = scmp.eq.s32.totalorder %s18, 0
      %p186 = por %p184, %p185
      %p187 = scmp.le.s32.totalorder 1, %s12
      %p188 = scmp.lt.s32.totalorder %s12, 3
      %p189 = pnand %p187, %p188
      %p190 = pneg %p189
      // Predicated region
      $region9: #{upsample_forward.3} parent=5 // pred_check
        _
      $region10: #{upsample_forward.3} parent=5 // pred_check_branch
        %192 = sbr.rel (%p189) target = $region12
      $region11: #{upsample_forward.3} parent=5 // pred_region
        %s193 = ssub.s32 %s12, 1
        // Predicated region
        $region13: #{upsample_forward.3} parent=11 // pred_check
          %p194 = pneg %p111
        $region14: #{upsample_forward.3} parent=11 // pred_check_branch
          %196 = sbr.rel (%p194) target = $region16
        $region15: #{upsample_forward.3} parent=11 // pred_region
          _
        $region16: #{upsample_forward.3} parent=11 // pred_fallthru
          _
        // Predicated region
        $region17: #{upsample_forward.3} parent=11 // pred_check
          %p197 = pneg %p132
        $region18: #{upsample_forward.3} parent=11 // pred_check_branch
          %199 = sbr.rel (%p197) target = $region20
        $region19: #{upsample_forward.3} parent=11 // pred_region
          _
        $region20: #{upsample_forward.3} parent=11 // pred_fallthru
          _
        // Predicated region
        $region21: #{upsample_forward.3} parent=11 // pred_check
          %p200 = pneg %p153
        $region22: #{upsample_forward.3} parent=11 // pred_check_branch
          %202 = sbr.rel (%p200) target = $region24
        $region23: #{upsample_forward.3} parent=11 // pred_region
          _
        $region24: #{upsample_forward.3} parent=11 // pred_fallthru
          _
      $region12: #{upsample_forward.3} parent=5 // pred_fallthru
        _
      %p203 = scmp.lt.s32.totalorder %s12, 2
      // Predicated region
      $region25: #{upsample_forward.3} parent=5 // pred_check
        %p204 = pneg %p203
      $region26: #{upsample_forward.3} parent=5 // pred_check_branch
        %206 = sbr.rel (%p204) target = $region28
      $region27: #{upsample_forward.3} parent=5 // pred_region
        // Predicated region
        $region29: #{upsample_forward.3} parent=27 // pred_check
          %p207 = pneg %p32
        $region30: #{upsample_forward.3} parent=27 // pred_check_branch
          %209 = sbr.rel (%p207) target = $region32
        $region31: #{upsample_forward.3} parent=27 // pred_region
          %s210 = sand.u32 %s22, 1
          %s211 = sand.u32 %s22, 1
          %s212 = smul.addr %s211, 64
          %s213 = scalar_lea.vmem [#allocation2], %s212
          %s214 = smul.u32 2, %s12
          %s215 = smul.addr %s214, 8
          %s216 = scalar_lea.vmem %s0, %s215
          // Predicated region
          $region33: #{upsample_forward.3} parent=31 // pred_check
            _
          $region34: #{upsample_forward.3} parent=31 // pred_check_branch
            %218 = sbr.rel (0) target = $region36
          $region35: #{upsample_forward.3} parent=31 // pred_region
            // Predicated region
            $region37: #{upsample_forward.3} parent=35 // pred_check
              _
            $region38: #{upsample_forward.3} parent=35 // pred_check_branch
              %220 = sbr.rel (0) target = $region40
            $region39: #{upsample_forward.3} parent=35 // pred_region
              loop: start=0, step=1, limit=1
              $region41: #{upsample_forward.3} parent=39 // loop_pre_header
                _
              $region42: #{upsample_forward.3} parent=39 // loop_header
                %s222 = sphi 0, %s226
                %p223 = scmp.ge.s32.totalorder %s222, 1
                %s227 = sphi %s216, %s216
                %s228 = sphi %s213, %s213
              $region43: #{upsample_forward.3} parent=39 // loop_header_branch
                %225 = sbr.rel (%p223) target = $region47
              $region44: #{upsample_forward.3} parent=39 // loop_body
                %v229 = vld [vmem:[%s227] sm:$0xff]
                %230 = vst [vmem:[%s228] sm:$0xff] %v229
                %v231 = vld [vmem:[%s227 + $0x8] sm:$0xff]
                %232 = vst [vmem:[%s228 + $0x8] sm:$0xff] %v231
                %v233 = vld [vmem:[%s227 + $0x20] sm:$0xff]
                %234 = vst [vmem:[%s228 + $0x10] sm:$0xff] %v233
                %v235 = vld [vmem:[%s227 + $0x28] sm:$0xff]
                %236 = vst [vmem:[%s228 + $0x18] sm:$0xff] %v235
                %v237 = vld [vmem:[%s227 + $0x40] sm:$0xff]
                %238 = vst [vmem:[%s228 + $0x20] sm:$0xff] %v237
                %v239 = vld [vmem:[%s227 + $0x48] sm:$0xff]
                %240 = vst [vmem:[%s228 + $0x28] sm:$0xff] %v239
                %v241 = vld [vmem:[%s227 + $0x60] sm:$0xff]
                %242 = vst [vmem:[%s228 + $0x30] sm:$0xff] %v241
                %v243 = vld [vmem:[%s227 + $0x68] sm:$0xff]
                %244 = vst [vmem:[%s228 + $0x38] sm:$0xff] %v243
              $region45: #{upsample_forward.3} parent=39 // loop_footer
                %s226 = sadd.s32 1, %s222
              $region46: #{upsample_forward.3} parent=39 // loop_footer_branch
                %221 = sbr.rel target = $region42
              $region47: #{upsample_forward.3} parent=39 // loop_exit
                _
            $region40: #{upsample_forward.3} parent=35 // pred_fallthru
              _
            // Predicated region
            $region48: #{upsample_forward.3} parent=35 // pred_check
              _
            $region49: #{upsample_forward.3} parent=35 // pred_check_branch
              %246 = sbr.rel target = $region51
            $region50: #{upsample_forward.3} parent=35 // pred_region
              _
            $region51: #{upsample_forward.3} parent=35 // pred_fallthru
              _
          $region36: #{upsample_forward.3} parent=31 // pred_fallthru
            _
          %247 = vnop
        $region32: #{upsample_forward.3} parent=27 // pred_fallthru
          _
        // Predicated region
        $region52: #{upsample_forward.3} parent=27 // pred_check
          %p248 = pneg %p58
        $region53: #{upsample_forward.3} parent=27 // pred_check_branch
          %250 = sbr.rel (%p248) target = $region55
        $region54: #{upsample_forward.3} parent=27 // pred_region
          %s251 = smul.u32 2, %s12
          %p252 = scmp.lt.s32.totalorder %s251, 3
          %s253 = scalar_select %p252, %s251, 3
          %s254 = scalar_lea.vmem %s1, %s253
          %s255 = smul.u32 2, %s12
        $region55: #{upsample_forward.3} parent=27 // pred_fallthru
          _
        // Predicated region
        $region56: #{upsample_forward.3} parent=27 // pred_check
          %p256 = pneg %p84
        $region57: #{upsample_forward.3} parent=27 // pred_check_branch
          %258 = sbr.rel (%p256) target = $region59
        $region58: #{upsample_forward.3} parent=27 // pred_region
          %s259 = smul.u32 2, %s12
          %p260 = scmp.lt.s32.totalorder %s259, 3
          %s261 = scalar_select %p260, %s259, 3
          %s262 = scalar_lea.vmem %s2, %s261
          %s263 = smul.u32 2, %s12
        $region59: #{upsample_forward.3} parent=27 // pred_fallthru
          _
      $region28: #{upsample_forward.3} parent=5 // pred_fallthru
        _
      %p264 = scmp.le.s32.totalorder 1, %s12
      %p265 = scmp.lt.s32.totalorder %s12, 3
      %p266 = pnand %p264, %p265
      %p267 = pneg %p266
      // Predicated region
      $region60: #{upsample_forward.3} parent=5 // pred_check
        _
      $region61: #{upsample_forward.3} parent=5 // pred_check_branch
        %269 = sbr.rel (%p266) target = $region63
      $region62: #{upsample_forward.3} parent=5 // pred_region
        %s270 = ssub.s32 %s12, 1
        %s271 = sand.u32 %s25, 1
        %s272 = sand.u32 %s25, 1
        %s273 = smul.addr %s272, 64
        %s274 = scalar_lea.vmem [#allocation2], %s273
        // Predicated region
        $region64: #{upsample_forward.3} parent=62 // pred_check
          %p275 = pneg %p38
        $region65: #{upsample_forward.3} parent=62 // pred_check_branch
          %277 = sbr.rel (%p275) target = $region67
        $region66: #{upsample_forward.3} parent=62 // pred_region
          _
        $region67: #{upsample_forward.3} parent=62 // pred_fallthru
          _
        %s278 = sand.u32 %s25, 1
        %s279 = sand.u32 %s25, 1
        %s280 = smul.addr %s279, 64
        %s281 = scalar_lea.vmem [#allocation2], %s280
        %p282 = pneg %p38
        %p283 = pneg %p35
        %s284 = smul.u32 2, %s17
        %p285 = scmp.lt.s32.totalorder %s284, 3
        %s286 = scalar_select %p285, %s284, 3
        %s287 = scalar_lea.vmem %s1, %s286
        %p288 = pneg %p64
        %p289 = pneg %p61
        %s290 = smul.u32 2, %s17
        %p291 = scmp.lt.s32.totalorder %s290, 3
        %s292 = scalar_select %p291, %s290, 3
        %s293 = scalar_lea.vmem %s2, %s292
        %p294 = pneg %p90
        %p295 = pneg %p87
        %p296 = pneg %p111
        %p297 = pneg %p108
        %p298 = pneg %p132
        %p299 = pneg %p129
        %p300 = pneg %p153
        %p301 = pneg %p150
        %p302 = pneg %p179
        %p303 = pneg %p176
        %s304 = sand.u32 %s166, 1
        %s305 = sand.u32 %s166, 1
        %s306 = smul.addr %s305, 64
        %s307 = scalar_lea.vmem [#allocation3], %s306
        %s308 = smul.u32 2, %s17
        %s309 = smul.u32 2, %s17
        %p310 = scmp.lt.s32.totalorder %s309, 3
        %s311 = scalar_select %p310, %s309, 3
        %s312 = scalar_lea.vmem %s1, %s311
        %s313 = smul.u32 2, %s17
        %s314 = smul.u32 2, %s17
        %p315 = scmp.lt.s32.totalorder %s314, 3
        %s316 = scalar_select %p315, %s314, 3
        %s317 = scalar_lea.vmem %s2, %s316
        %s318 = smul.u32 2, %s17
        %s319 = smul.u32 2, %s17
        %v321 = vld [vmem:[%s3] sm:$0xff]
        %v322 = vld [vmem:[%s4] sm:$0xff]
        %v323 = vld [vmem:[%s274] sm:$0xff]
        %v324 = vld [vmem:[%s274 + $0x8] sm:$0xff]
        %v325 = vld [vmem:[%s274 + $0x10] sm:$0xff]
        %v326 = vld [vmem:[%s274 + $0x18] sm:$0xff]
        %v327 = vld [vmem:[%s274 + $0x20] sm:$0xff]
        %v328 = vld [vmem:[%s274 + $0x28] sm:$0xff]
        %v329 = vld [vmem:[%s274 + $0x30] sm:$0xff]
        %v330 = vld [vmem:[%s274 + $0x38] sm:$0xff]
        %v331 = vld [vmem:[%s312] sm:$0x3]
        %v332 = vld [vmem:[%s317] sm:$0x3]
        %334 = vset.pattern.permute.xlu0 0
        %335 = vperm.xlu0 %334, %v321
        %v336 = vpop.permute.xlu0 %335
        %v338 = vmul.f32 %v323, %v336
        %v339 = vmul.f32 %v324, %v336
        %341 = vset.pattern.permute.xlu0 0
        %342 = vperm.xlu0 %341, %v322
        %v343 = vpop.permute.xlu0 %342
        %v345 = vadd.f32 %v338, %v343
        %v346 = vadd.f32 %v339, %v343
        %v347 = vmax.f32 %v345, 0.0
        %v348 = vmax.f32 %v346, 0.0
        %v349 = vmul.f32 %v325, %v336
        %v350 = vmul.f32 %v326, %v336
        %v351 = vadd.f32 %v349, %v343
        %v352 = vadd.f32 %v350, %v343
        %v353 = vmax.f32 %v351, 0.0
        %v354 = vmax.f32 %v352, 0.0
        %v356 = vlaneseq
        %v357 = vshrl.u32 %v356, 7
        %v358 = vsub.s32 0, %v357
        %v359 = vrot.slane %v332, %v358
        %v360 = vlaneseq
        %v361 = vshrl.u32 %v360, 7
        %v362 = vsub.s32 1, %v361
        %v363 = vrot.slane %v332, %v362
        %v366 = vmul.f32 %v353, %v359
        %v367 = vmul.f32 %v354, %v363
        %v368 = vmul.f32 %v327, %v336
        %v369 = vmul.f32 %v328, %v336
        %v370 = vadd.f32 %v368, %v343
        %v371 = vadd.f32 %v369, %v343
        %v372 = vmax.f32 %v370, 0.0
        %v373 = vmax.f32 %v371, 0.0
        %v375 = vlaneseq
        %v376 = vshrl.u32 %v375, 7
        %v377 = vsub.s32 0, %v376
        %v378 = vrot.slane %v331, %v377
        %v379 = vlaneseq
        %v380 = vshrl.u32 %v379, 7
        %v381 = vsub.s32 1, %v380
        %v382 = vrot.slane %v331, %v381
        %v385 = vmul.f32 %v372, %v378
        %v386 = vmul.f32 %v373, %v382
        %v387 = vmul.f32 %v329, %v336
        %v388 = vmul.f32 %v330, %v336
        %v389 = vadd.f32 %v387, %v343
        %v390 = vadd.f32 %v388, %v343
        %v391 = vmax.f32 %v389, 0.0
        %v392 = vmax.f32 %v390, 0.0
        %v393 = vmul.f32 %v331, %v332
        %v395 = vlaneseq
        %v396 = vshrl.u32 %v395, 7
        %v397 = vsub.s32 0, %v396
        %v398 = vrot.slane %v393, %v397
        %v399 = vlaneseq
        %v400 = vshrl.u32 %v399, 7
        %v401 = vsub.s32 1, %v400
        %v402 = vrot.slane %v393, %v401
        %v405 = vmul.f32 %v391, %v398
        %v406 = vmul.f32 %v392, %v402
        %v407 = vpack.c.bf16 %v366, %v347
        %v408 = vpack.c.bf16 %v367, %v348
        %v409 = vpack.c.bf16 %v405, %v385
        %v410 = vpack.c.bf16 %v406, %v386
        %v411 = vld [vmem:[%s5] sm:$0xf]
        %v412 = vld [vmem:[%s5 + $0x4] sm:$0xf]
        %v413 = vld [vmem:[%s5 + $0x8] sm:$0xf]
        %v414 = vld [vmem:[%s5 + $0xc] sm:$0xf]
        %v419 = vunpack.c.l.b16 %v411
        %v420 = vunpack.c.l.b16 %v412
        %v421 = vunpack.c.l.b16 %v413
        %v422 = vunpack.c.l.b16 %v414
        %v423 = vpack.c.b16 %v420, %v419
        %v424 = vpack.c.b16 %v422, %v421
        %vm425 = vcmask 261120
        %v427 = vsel %vm425, %v423, 0
        %v430 = vsel %vm425, %v424, 0
        %432 = vmatprep.subr.bf16.mxu0 0
        %433 = vmatpush1.bf16.msra.mxu0 0
        %434 = vmatprep.subr.bf16.mxu0 0
        %435 = vmatpush1.bf16.msra.mxu0 0
        %436 = vmatprep.subr.bf16.mxu0 0
        %437 = vmatpush1.bf16.msra.mxu0 0
        %438 = vmatprep.subr.bf16.mxu0 0
        %439 = vmatpush1.bf16.msra.mxu0 0
        %440 = vmatprep.subr.bf16.mxu0 0
        %441 = vmatpush1.bf16.msra.mxu0 0
        %442 = vmatprep.subr.bf16.mxu0 0
        %443 = vmatpush1.bf16.msra.mxu0 0
        %444 = vmatprep.subr.bf16.mxu0 %v410
        %445 = vmatpush1.bf16.msra.mxu0 %v409
        %446 = vmatprep.subr.bf16.mxu0 %v408
        %447 = vmatpush1.bf16.msra.mxu0 %v407
        %448 = vmatprep.subr.bf16.mxu0 0
        %449 = vmatpush2.bf16.msra.mxu0 0
        %450 = vmatprep.subr.bf16.mxu0 0
        %451 = vmatpush2.bf16.msra.mxu0 0
        %452 = vmatprep.subr.bf16.mxu0 0
        %453 = vmatpush2.bf16.msra.mxu0 0
        %454 = vmatprep.subr.bf16.mxu0 0
        %455 = vmatpush2.bf16.msra.mxu0 0
        %456 = vmatprep.subr.bf16.mxu0 0
        %457 = vmatpush2.bf16.msra.mxu0 0
        %458 = vmatprep.subr.bf16.mxu0 0
        %459 = vmatpush2.bf16.msra.mxu0 0
        %460 = vmatprep.subr.bf16.mxu0 0
        %461 = vmatpush2.bf16.msra.mxu0 0
        %462 = vmatprep.subr.bf16.mxu0 0
        %463 = vmatpush2.bf16.msra.mxu0 0
        %464 = vmatprep.mubr.bf16.mxu0 0
        %465 = vmatmul.mubr.bf16.gmra.mxu0 %v427
        %v466 = vpop.f32.mrf.mxu0
        %v467 = vadd.f32 0.0, %v466
        %v468 = vpop.f32.mrf.mxu0
        %v469 = vadd.f32 0.0, %v468
        %v470 = vpop.f32.mrf.mxu0
        %v471 = vadd.f32 0.0, %v470
        %v472 = vpop.f32.mrf.mxu0
        %v473 = vadd.f32 0.0, %v472
        %474 = vmatprep.mubr.bf16.mxu0 0
        %475 = vmatmul.mubr.bf16.gmra.mxu0 %v430
        %v476 = vpop.f32.mrf.mxu0
        %v477 = vadd.f32 0.0, %v476
        %v478 = vpop.f32.mrf.mxu0
        %v479 = vadd.f32 0.0, %v478
        %v480 = vpop.f32.mrf.mxu0
        %v481 = vadd.f32 0.0, %v480
        %v482 = vpop.f32.mrf.mxu0
        %v483 = vadd.f32 0.0, %v482
        %484 = vdwg.mxu0
        %485 = vst [vmem:[%s307] sm:$0xff] %v467
        %486 = vst [vmem:[%s307 + $0x8] sm:$0xff] %v469
        %487 = vst [vmem:[%s307 + $0x10] sm:$0xff] %v471
        %488 = vst [vmem:[%s307 + $0x18] sm:$0xff] %v473
        %489 = vst [vmem:[%s307 + $0x20] sm:$0xff] %v477
        %490 = vst [vmem:[%s307 + $0x28] sm:$0xff] %v479
        %491 = vst [vmem:[%s307 + $0x30] sm:$0xff] %v481
        %492 = vst [vmem:[%s307 + $0x38] sm:$0xff] %v483
        %s493 = sand.u32 %s166, 1
        %s494 = sand.u32 %s166, 1
        %s495 = smul.addr %s494, 64
        %s496 = scalar_lea.vmem [#allocation3], %s495
        // Predicated region
        $region68: #{upsample_forward.3} parent=62 // pred_check
          %p497 = pneg %p176
        $region69: #{upsample_forward.3} parent=62 // pred_check_branch
          %499 = sbr.rel (%p497) target = $region71
        $region70: #{upsample_forward.3} parent=62 // pred_region
          %s500 = smul.u32 2, %s17
          %s501 = smul.addr %s500, 8
          %s502 = scalar_lea.vmem %s6, %s501
          // Predicated region
          $region72: #{upsample_forward.3} parent=70 // pred_check
            _
          $region73: #{upsample_forward.3} parent=70 // pred_check_branch
            %504 = sbr.rel (0) target = $region75
          $region74: #{upsample_forward.3} parent=70 // pred_region
            // Predicated region
            $region76: #{upsample_forward.3} parent=74 // pred_check
              _
            $region77: #{upsample_forward.3} parent=74 // pred_check_branch
              %506 = sbr.rel (0) target = $region79
            $region78: #{upsample_forward.3} parent=74 // pred_region
              loop: start=0, step=1, limit=1
              $region80: #{upsample_forward.3} parent=78 // loop_pre_header
                _
              $region81: #{upsample_forward.3} parent=78 // loop_header
                %s508 = sphi 0, %s512
                %p509 = scmp.ge.s32.totalorder %s508, 1
                %s513 = sphi %s496, %s496
                %s514 = sphi %s502, %s502
              $region82: #{upsample_forward.3} parent=78 // loop_header_branch
                %511 = sbr.rel (%p509) target = $region86
              $region83: #{upsample_forward.3} parent=78 // loop_body
                %v515 = vld [vmem:[%s513] sm:$0xff]
                %516 = vst [vmem:[%s514] sm:$0xff] %v515
                %v517 = vld [vmem:[%s513 + $0x8] sm:$0xff]
                %518 = vst [vmem:[%s514 + $0x8] sm:$0xff] %v517
                %v519 = vld [vmem:[%s513 + $0x10] sm:$0xff]
                %520 = vst [vmem:[%s514 + $0x20] sm:$0xff] %v519
                %v521 = vld [vmem:[%s513 + $0x18] sm:$0xff]
                %522 = vst [vmem:[%s514 + $0x28] sm:$0xff] %v521
                %v523 = vld [vmem:[%s513 + $0x20] sm:$0xff]
                %524 = vst [vmem:[%s514 + $0x40] sm:$0xff] %v523
                %v525 = vld [vmem:[%s513 + $0x28] sm:$0xff]
                %526 = vst [vmem:[%s514 + $0x48] sm:$0xff] %v525
                %v527 = vld [vmem:[%s513 + $0x30] sm:$0xff]
                %528 = vst [vmem:[%s514 + $0x60] sm:$0xff] %v527
                %v529 = vld [vmem:[%s513 + $0x38] sm:$0xff]
                %530 = vst [vmem:[%s514 + $0x68] sm:$0xff] %v529
              $region84: #{upsample_forward.3} parent=78 // loop_footer
                %s512 = sadd.s32 1, %s508
              $region85: #{upsample_forward.3} parent=78 // loop_footer_branch
                %507 = sbr.rel target = $region81
              $region86: #{upsample_forward.3} parent=78 // loop_exit
                _
            $region79: #{upsample_forward.3} parent=74 // pred_fallthru
              _
            // Predicated region
            $region87: #{upsample_forward.3} parent=74 // pred_check
              _
            $region88: #{upsample_forward.3} parent=74 // pred_check_branch
              %532 = sbr.rel target = $region90
            $region89: #{upsample_forward.3} parent=74 // pred_region
              _
            $region90: #{upsample_forward.3} parent=74 // pred_fallthru
              _
          $region75: #{upsample_forward.3} parent=70 // pred_fallthru
            _
          %533 = vnop
        $region71: #{upsample_forward.3} parent=62 // pred_fallthru
          _
      $region63: #{upsample_forward.3} parent=5 // pred_fallthru
        _
      %p534 = scmp.le.s32.totalorder 2, %s12
      // Predicated region
      $region91: #{upsample_forward.3} parent=5 // pred_check
        %p535 = pneg %p534
      $region92: #{upsample_forward.3} parent=5 // pred_check_branch
        %537 = sbr.rel (%p535) target = $region94
      $region93: #{upsample_forward.3} parent=5 // pred_region
        %s538 = ssub.s32 %s12, 2
        // Predicated region
        $region95: #{upsample_forward.3} parent=93 // pred_check
          %p539 = pneg %p182
        $region96: #{upsample_forward.3} parent=93 // pred_check_branch
          %541 = sbr.rel (%p539) target = $region98
        $region97: #{upsample_forward.3} parent=93 // pred_region
          %s542 = sand.u32 %s167, 1
          %s543 = sand.u32 %s167, 1
          %s544 = smul.addr %s543, 64
          %s545 = scalar_lea.vmem [#allocation3], %s544
        $region98: #{upsample_forward.3} parent=93 // pred_fallthru
          _
      $region94: #{upsample_forward.3} parent=5 // pred_fallthru
        _
    $region6: #{upsample_forward.3} parent=1 // loop_footer
      %s16 = sadd.s32 1, %s12
    $region7: #{upsample_forward.3} parent=1 // loop_footer_branch
      %11 = sbr.rel target = $region3
    $region8: #{upsample_forward.3} parent=1 // loop_exit
      _

</llo_original>
